<compile_context>
chip_gen: v5e
topology: v5e:2x2
jax: 0.10.0
libtpu: 0.0.40
codegen_flags: <defaults>
</compile_context>

<pallas_src>
import jax
import jax.numpy as jnp
from jax.experimental import pallas as pl
from jax.experimental.pallas import tpu as pltpu


# ----------------------------- Pallas kernels ------------------------------

_BN_EPS = 1e-5


def _conv1_bn_relu_kernel(p_ref, w_ref, b_ref, g_ref, beta_ref, o_ref):
    """out = relu(BN(W @ P + b)) with training-mode (batch) statistics.

    P: (K, M) patches, M = B*Ho*Wo on the lane axis (lane-dense).
    W: (Cout, K);  b/gamma/beta: (Cout, 1);  out: (Cout, M).
    """
    z = jnp.dot(w_ref[...], p_ref[...], preferred_element_type=jnp.float32)
    z = z + b_ref[...]                                  # (Cout, M)
    mean = jnp.mean(z, axis=1, keepdims=True)           # per-channel batch stats
    zc = z - mean
    var = jnp.mean(zc * zc, axis=1, keepdims=True)      # biased var (PyTorch BN)
    scale = g_ref[...] * jax.lax.rsqrt(var + _BN_EPS)
    o_ref[...] = jnp.maximum(zc * scale + beta_ref[...], 0.0)


def _conv_relu_kernel(p_ref, w_ref, b_ref, o_ref):
    """out = relu(W @ P + b), lane-dense (Cout, M_block) output."""
    z = jnp.dot(w_ref[...], p_ref[...], preferred_element_type=jnp.float32)
    o_ref[...] = jnp.maximum(z + b_ref[...], 0.0)


def _tail_kernel(p4_ref, w4_ref, b4_ref, w1_ref, b1_ref, w2_ref, b2_ref, o_ref):
    """conv4 + ReLU + (dropout identity) + flatten + fc1 + ReLU + fc2 + log_softmax.

    p4: (B*hw, 9*Cin) patch rows ordered (b, i, j);  w4: (9*Cin, C4).
    w1: (hw*C4, dim5) rows ordered (ij, c) -- the PyTorch (c, i, j) flatten
        order is folded into the weight on the host;  w2: (dim5, 10).
    """
    batch = o_ref.shape[0]
    hw = p4_ref.shape[0] // batch              # spatial positions per image (4*4)

    h4 = jnp.dot(p4_ref[...], w4_ref[...], preferred_element_type=jnp.float32)
    h4 = jnp.maximum(h4 + b4_ref[...], 0.0)    # (B*hw, C4)
    # TODO(synk): training-mode Dropout2d channel masking (PyTorch RNG) not
    # reproduced; identity / eval semantics used here.

    # Flatten each image to one lane-dense row via static row slices + lane
    # concatenation (avoids an in-kernel (B*hw, C4) -> (B, hw*C4) relayout).
    rows = []
    for b in range(batch):
        pieces = [h4[b * hw + m:b * hw + m + 1, :] for m in range(hw)]
        rows.append(jnp.concatenate(pieces, axis=1))     # (1, hw*C4)
    xflat = jnp.concatenate(rows, axis=0)                # (B, hw*C4)

    z1 = jnp.dot(xflat, w1_ref[...], preferred_element_type=jnp.float32)
    z1 = jnp.maximum(z1 + b1_ref[...], 0.0)              # (B, dim5)
    z2 = jnp.dot(z1, w2_ref[...], preferred_element_type=jnp.float32)
    z2 = z2 + b2_ref[...]                                # (B, 10)

    m = jnp.max(z2, axis=-1, keepdims=True)
    lse = m + jnp.log(jnp.sum(jnp.exp(z2 - m), axis=-1, keepdims=True))
    o_ref[...] = (z2 - lse).astype(o_ref.dtype)


# ------------------------------ call wrappers -------------------------------

def conv1_bn_relu(p, w, b, gamma, beta):
    cout, k = w.shape
    m = p.shape[1]
    return pl.pallas_call(
        _conv1_bn_relu_kernel,
        out_shape=jax.ShapeDtypeStruct((cout, m), jnp.float32),
        grid=(1,),
        in_specs=[
            pl.BlockSpec((k, m), lambda i: (0, 0)),
            pl.BlockSpec((cout, k), lambda i: (0, 0)),
            pl.BlockSpec((cout, 1), lambda i: (0, 0)),
            pl.BlockSpec((cout, 1), lambda i: (0, 0)),
            pl.BlockSpec((cout, 1), lambda i: (0, 0)),
        ],
        out_specs=pl.BlockSpec((cout, m), lambda i: (0, 0)),
    )(p, w, b, gamma, beta)


def conv_relu(p, w, b):
    cout, k = w.shape
    m = p.shape[1]
    # 2-way 'parallel' split along the lane-dense M axis when both halves stay
    # 128-lane multiples: lets v7x shard across its two TensorCores.
    mb = 2 if (m % 256 == 0) else 1
    bm = m // mb
    return pl.pallas_call(
        _conv_relu_kernel,
        out_shape=jax.ShapeDtypeStruct((cout, m), jnp.float32),
        grid=(mb,),
        in_specs=[
            pl.BlockSpec((k, bm), lambda i: (0, i)),
            pl.BlockSpec((cout, k), lambda i: (0, 0)),
            pl.BlockSpec((cout, 1), lambda i: (0, 0)),
        ],
        out_specs=pl.BlockSpec((cout, bm), lambda i: (0, i)),
        compiler_params=pltpu.CompilerParams(dimension_semantics=("parallel",)),
    )(p, w, b)


def conv4_mlp_head(p4, w4, b4, w1, b1, w2, b2, batch):
    return pl.pallas_call(
        _tail_kernel,
        out_shape=jax.ShapeDtypeStruct((batch, 10), jnp.float32),
        grid=(1,),
        in_specs=[
            pl.BlockSpec(p4.shape, lambda i: (0, 0)),
            pl.BlockSpec(w4.shape, lambda i: (0, 0)),
            pl.BlockSpec(b4.shape, lambda i: (0, 0)),
            pl.BlockSpec(w1.shape, lambda i: (0, 0)),
            pl.BlockSpec(b1.shape, lambda i: (0, 0)),
            pl.BlockSpec(w2.shape, lambda i: (0, 0)),
            pl.BlockSpec(b2.shape, lambda i: (0, 0)),
        ],
        out_specs=pl.BlockSpec((batch, 10), lambda i: (0, 0)),
    )(p4, w4, b4, w1, b1, w2, b2)


# ------------------------------ XLA glue (thin) ------------------------------

def _tap_stack(h_cf):
    """3x3 / stride-2 / pad-1 tap extraction on a channel-first (C, B, H, W)
    activation.  Returns (9, C, B, H//2, W//2).  Thin XLA glue only."""
    _, _, h, w = h_cf.shape
    ho, wo = h // 2, w // 2
    hp = jnp.pad(h_cf, ((0, 0), (0, 0), (1, 1), (1, 1)))
    taps = [hp[:, :, kh:kh + 2 * ho:2, kw:kw + 2 * wo:2]
            for kh in range(3) for kw in range(3)]
    return jnp.stack(taps, axis=0)


def _patches_km(h_cf):
    """Patch matrix (9*C, B*Ho*Wo): K ordered (kh, kw, cin), M ordered (b, i, j)."""
    t = _tap_stack(h_cf)
    _, c, b, ho, wo = t.shape
    return t.reshape(9 * c, b * ho * wo)


# ----------------------------- parameter handling ----------------------------

def _xavier_normal(key, shape, fan_in, fan_out, gain=1.0):
    std = gain * (2.0 / (fan_in + fan_out)) ** 0.5
    return std * jax.random.normal(key, shape, dtype=jnp.float32)


def init_params(key, dim1, dim2, dim3, dim4, dim5):
    """Parameters in PyTorch-native layouts (conv OIHW, linear (out, in))."""
    ks = jax.random.split(key, 12)
    p = {}
    conv_io = [(3, dim1), (dim1, dim2), (dim2, dim3), (dim3, dim4)]
    for n, (cin, cout) in enumerate(conv_io, start=1):
        p[f"conv{n}_w"] = _xavier_normal(ks[2 * (n - 1)], (cout, cin, 3, 3),
                                         fan_in=cin * 9, fan_out=cout * 9)
        p[f"conv{n}_b"] = jax.random.uniform(ks[2 * n - 1], (cout,),
                                             dtype=jnp.float32,
                                             minval=0.0, maxval=0.2)
    p["bn_gamma"] = jnp.ones((dim1,), jnp.float32)   # fresh nn.BatchNorm2d
    p["bn_beta"] = jnp.zeros((dim1,), jnp.float32)
    p["ln1_w"] = _xavier_normal(ks[8], (dim5, 4 * 4 * dim4),
                                fan_in=4 * 4 * dim4, fan_out=dim5)
    p["ln1_b"] = jax.random.uniform(ks[9], (dim5,), dtype=jnp.float32,
                                    minval=0.0, maxval=0.2)
    p["ln2_w"] = _xavier_normal(ks[10], (10, dim5), fan_in=dim5, fan_out=10)
    p["ln2_b"] = jax.random.uniform(ks[11], (10,), dtype=jnp.float32,
                                    minval=0.0, maxval=0.2)
    return p


def prepare_params(p):
    """One-time re-layout of PyTorch-style params into the layouts the Pallas
    kernels consume (called outside the jitted forward)."""
    kp = {}
    for n in (1, 2, 3):
        w = p[f"conv{n}_w"]                                      # (Cout, Cin, 3, 3)
        cout = w.shape[0]
        # (Cout, 9*Cin), K ordered (kh, kw, cin) -> matches patch K ordering
        kp[f"cw{n}"] = jnp.transpose(w, (0, 2, 3, 1)).reshape(cout, -1)
        kp[f"cb{n}"] = p[f"conv{n}_b"].reshape(cout, 1)
    w4 = p["conv4_w"]
    c4 = w4.shape[0]
    kp["cw4"] = jnp.transpose(w4, (2, 3, 1, 0)).reshape(-1, c4)  # (9*Cin, Cout)
    kp["cb4"] = p["conv4_b"].reshape(1, c4)
    kp["gamma"] = p["bn_gamma"].reshape(-1, 1)
    kp["beta"] = p["bn_beta"].reshape(-1, 1)
    # fc1: PyTorch flattens conv4 output in (c, i, j) order; the kernel flattens
    # it in (ij, c) order, so fold the permutation into the weight here.
    dim5, nin = p["ln1_w"].shape
    hw = nin // c4                                               # 4*4 = 16
    w1 = p["ln1_w"].reshape(dim5, c4, hw)                        # (n, c, ij)
    kp["fw1"] = jnp.transpose(w1, (2, 1, 0)).reshape(hw * c4, dim5)
    kp["fb1"] = p["ln1_b"].reshape(1, dim5)
    kp["fw2"] = jnp.transpose(p["ln2_w"], (1, 0))                # (dim5, 10)
    kp["fb2"] = p["ln2_b"].reshape(1, 10)
    return kp


# --------------------------------- forward ----------------------------------

def net_forward(kp, x_nchw):
    b, _, h, w = x_nchw.shape
    x_cf = jnp.transpose(x_nchw, (1, 0, 2, 3))                   # (Cin, B, H, W)

    # conv1 + BatchNorm(batch stats) + ReLU -- one fused Pallas call.
    p1 = _patches_km(x_cf)                                       # (27, B*H/2*W/2)
    h1 = conv1_bn_relu(p1, kp["cw1"], kp["cb1"], kp["gamma"], kp["beta"])
    h1 = h1.reshape(h1.shape[0], b, h // 2, w // 2)

    # conv2 + ReLU (2-way 'parallel' grid along the lane-dense M axis).
    p2 = _patches_km(h1)
    h2 = conv_relu(p2, kp["cw2"], kp["cb2"])
    h2 = h2.reshape(h2.shape[0], b, h // 4, w // 4)

    # conv3 + ReLU.
    p3 = _patches_km(h2)
    h3 = conv_relu(p3, kp["cw3"], kp["cb3"])
    h3 = h3.reshape(h3.shape[0], b, h // 8, w // 8)

    # conv4 + ReLU + dropout(identity) + flatten + fc1 + ReLU + fc2
    # + log_softmax fused into a single Pallas call.  Patch rows (b, i, j),
    # columns (kh, kw, cin).
    t4 = _tap_stack(h3)                                          # (9, d3, B, 4, 4)
    hw = (h // 16) * (w // 16)
    p4 = jnp.transpose(t4, (2, 3, 4, 0, 1)).reshape(b * hw, -1)  # (B*16, 9*d3)
    return conv4_mlp_head(p4, kp["cw4"], kp["cb4"],
                          kp["fw1"], kp["fb1"], kp["fw2"], kp["fb2"], b)


# ----------------------------------- main ------------------------------------

if __name__ == "__main__":
    # Sizes consistent with the module: input 64x64 so four stride-2 convs
    # give a 4x4 map, matching ln1's 4*4*dim4 input.
    dim1, dim2, dim3, dim4, dim5 = 8, 16, 16, 16, 32
    B = 2

    key = jax.random.PRNGKey(0)
    pkey, xkey = jax.random.split(key)
    params = init_params(pkey, dim1, dim2, dim3, dim4, dim5)
    kparams = prepare_params(params)        # one-time weight re-layout (host/XLA)
    x = jax.random.normal(xkey, (B, 3, 64, 64), dtype=jnp.float32)

    out = jax.jit(net_forward)(kparams, x)
    out = jax.block_until_ready(out)

    assert out.shape == (B, 10)
    assert bool(jnp.all(jnp.isfinite(out)))
    # rows of log_softmax exponentiate-sum to ~1
    assert bool(jnp.all(jnp.abs(jnp.sum(jnp.exp(out), axis=1) - 1.0) < 1e-4))
    print("KERNEL_OK")
</pallas_src>

<mosaic_0001>
module attributes {stable_mosaic.version = 11 : i64} {
  func.func @_conv1_bn_relu_kernel(%arg0: i32, %arg1: memref<27x2048xf32, #tpu.memory_space<vmem>>, %arg2: memref<8x27xf32, #tpu.memory_space<vmem>>, %arg3: memref<8x1xf32, #tpu.memory_space<vmem>>, %arg4: memref<8x1xf32, #tpu.memory_space<vmem>>, %arg5: memref<8x1xf32, #tpu.memory_space<vmem>>, %arg6: memref<8x2048xf32, #tpu.memory_space<vmem>>) attributes {dimension_semantics = [#tpu.dimension_semantics<arbitrary>], iteration_bounds = array<i64: 1>, scalar_prefetch = 0 : i64, scratch_operands = 0 : i64, tpu.core_type = #tpu.core_type<tc>, window_params = [{pipeline_mode = #tpu.pipeline_mode<synchronous>, transform_indices = @transform_0, window_bounds = array<i64: 27, 2048>}, {pipeline_mode = #tpu.pipeline_mode<synchronous>, transform_indices = @transform_1, window_bounds = array<i64: 8, 27>}, {pipeline_mode = #tpu.pipeline_mode<synchronous>, transform_indices = @transform_2, window_bounds = array<i64: 8, 1>}, {pipeline_mode = #tpu.pipeline_mode<synchronous>, transform_indices = @transform_3, window_bounds = array<i64: 8, 1>}, {pipeline_mode = #tpu.pipeline_mode<synchronous>, transform_indices = @transform_4, window_bounds = array<i64: 8, 1>}, {pipeline_mode = #tpu.pipeline_mode<synchronous>, transform_indices = @transform_5, window_bounds = array<i64: 8, 2048>}]} {
    %c0 = arith.constant 0 : index
    %c0_0 = arith.constant 0 : index
    %0 = vector.load %arg2[%c0, %c0_0] : memref<8x27xf32, #tpu.memory_space<vmem>>, vector<8x27xf32>
    %c0_1 = arith.constant 0 : index
    %c0_2 = arith.constant 0 : index
    %1 = vector.load %arg1[%c0_1, %c0_2] : memref<27x2048xf32, #tpu.memory_space<vmem>>, vector<27x2048xf32>
    %cst = arith.constant dense<0.000000e+00> : vector<8x2048xf32>
    %2 = tpu.matmul %0, %1, %cst {dimension_numbers = #tpu.dot_dimension_numbers<[1], [0], [0], [1], [0, 0, 1, 1], [], []>} : vector<8x27xf32>, vector<27x2048xf32>, vector<8x2048xf32> -> vector<8x2048xf32>
    %c0_3 = arith.constant 0 : index
    %c0_4 = arith.constant 0 : index
    %3 = vector.load %arg3[%c0_3, %c0_4] : memref<8x1xf32, #tpu.memory_space<vmem>>, vector<8x1xf32>
    %4 = vector.broadcast %3 : vector<8x1xf32> to vector<8x2048xf32>
    %5 = arith.addf %2, %4 : vector<8x2048xf32>
    %cst_5 = arith.constant dense<0.000000e+00> : vector<8xf32>
    %6 = vector.multi_reduction <add>, %5, %cst_5 [1] : vector<8x2048xf32> to vector<8xf32>
    %7 = vector.shape_cast %6 : vector<8xf32> to vector<8x1xf32>
    %cst_6 = arith.constant 2.048000e+03 : f32
    %8 = vector.broadcast %cst_6 : f32 to vector<8x1xf32>
    %9 = arith.divf %7, %8 : vector<8x1xf32>
    %10 = vector.broadcast %9 : vector<8x1xf32> to vector<8x2048xf32>
    %11 = arith.subf %5, %10 : vector<8x2048xf32>
    %12 = arith.mulf %11, %11 : vector<8x2048xf32>
    %cst_7 = arith.constant dense<0.000000e+00> : vector<8xf32>
    %13 = vector.multi_reduction <add>, %12, %cst_7 [1] : vector<8x2048xf32> to vector<8xf32>
    %14 = vector.shape_cast %13 : vector<8xf32> to vector<8x1xf32>
    %cst_8 = arith.constant 2.048000e+03 : f32
    %15 = vector.broadcast %cst_8 : f32 to vector<8x1xf32>
    %16 = arith.divf %14, %15 : vector<8x1xf32>
    %c0_9 = arith.constant 0 : index
    %c0_10 = arith.constant 0 : index
    %17 = vector.load %arg4[%c0_9, %c0_10] : memref<8x1xf32, #tpu.memory_space<vmem>>, vector<8x1xf32>
    %cst_11 = arith.constant 9.99999974E-6 : f32
    %18 = vector.broadcast %cst_11 : f32 to vector<8x1xf32>
    %19 = arith.addf %16, %18 : vector<8x1xf32>
    %20 = math.rsqrt %19 : vector<8x1xf32>
    %21 = arith.mulf %17, %20 : vector<8x1xf32>
    %22 = vector.broadcast %21 : vector<8x1xf32> to vector<8x2048xf32>
    %23 = arith.mulf %11, %22 : vector<8x2048xf32>
    %c0_12 = arith.constant 0 : index
    %c0_13 = arith.constant 0 : index
    %24 = vector.load %arg5[%c0_12, %c0_13] : memref<8x1xf32, #tpu.memory_space<vmem>>, vector<8x1xf32>
    %25 = vector.broadcast %24 : vector<8x1xf32> to vector<8x2048xf32>
    %26 = arith.addf %23, %25 : vector<8x2048xf32>
    %cst_14 = arith.constant 0.000000e+00 : f32
    %27 = vector.broadcast %cst_14 : f32 to vector<8x2048xf32>
    %28 = arith.maximumf %26, %27 : vector<8x2048xf32>
    %c0_15 = arith.constant 0 : index
    %c0_16 = arith.constant 0 : index
    %29 = vector.load %arg6[%c0_15, %c0_16] : memref<8x2048xf32, #tpu.memory_space<vmem>>, vector<8x2048xf32>
    tpu.vector_store %arg6[%c0_15, %c0_16], %28 {strides = array<i32>} : memref<8x2048xf32, #tpu.memory_space<vmem>>, vector<8x2048xf32>,
    return
  }
  func.func @transform_0(%arg0: i32) -> (i32, i32) {
    %c0_i32 = arith.constant 0 : i32
    %c0_i32_0 = arith.constant 0 : i32
    %c0_i32_1 = arith.constant 0 : i32
    return %c0_i32, %c0_i32_0 : i32, i32
  }
  func.func @transform_1(%arg0: i32) -> (i32, i32) {
    %c0_i32 = arith.constant 0 : i32
    %c0_i32_0 = arith.constant 0 : i32
    %c0_i32_1 = arith.constant 0 : i32
    return %c0_i32, %c0_i32_0 : i32, i32
  }
  func.func @transform_2(%arg0: i32) -> (i32, i32) {
    %c0_i32 = arith.constant 0 : i32
    %c0_i32_0 = arith.constant 0 : i32
    %c0_i32_1 = arith.constant 0 : i32
    return %c0_i32, %c0_i32_0 : i32, i32
  }
  func.func @transform_3(%arg0: i32) -> (i32, i32) {
    %c0_i32 = arith.constant 0 : i32
    %c0_i32_0 = arith.constant 0 : i32
    %c0_i32_1 = arith.constant 0 : i32
    return %c0_i32, %c0_i32_0 : i32, i32
  }
  func.func @transform_4(%arg0: i32) -> (i32, i32) {
    %c0_i32 = arith.constant 0 : i32
    %c0_i32_0 = arith.constant 0 : i32
    %c0_i32_1 = arith.constant 0 : i32
    return %c0_i32, %c0_i32_0 : i32, i32
  }
  func.func @transform_5(%arg0: i32) -> (i32, i32) {
    %c0_i32 = arith.constant 0 : i32
    %c0_i32_0 = arith.constant 0 : i32
    %c0_i32_1 = arith.constant 0 : i32
    return %c0_i32, %c0_i32_0 : i32, i32
  }
}

module attributes {stable_mosaic.version = 11 : i64} {
  func.func @_conv_relu_kernel(%arg0: i32, %arg1: memref<72x256xf32, #tpu.memory_space<vmem>>, %arg2: memref<16x72xf32, #tpu.memory_space<vmem>>, %arg3: memref<16x1xf32, #tpu.memory_space<vmem>>, %arg4: memref<16x256xf32, #tpu.memory_space<vmem>>) attributes {dimension_semantics = [#tpu.dimension_semantics<parallel>], iteration_bounds = array<i64: 2>, scalar_prefetch = 0 : i64, scratch_operands = 0 : i64, tpu.core_type = #tpu.core_type<tc>, window_params = [{transform_indices = @transform_0, window_bounds = array<i64: 72, 256>}, {pipeline_mode = #tpu.pipeline_mode<synchronous>, transform_indices = @transform_1, window_bounds = array<i64: 16, 72>}, {pipeline_mode = #tpu.pipeline_mode<synchronous>, transform_indices = @transform_2, window_bounds = array<i64: 16, 1>}, {transform_indices = @transform_3, window_bounds = array<i64: 16, 256>}]} {
    %c0 = arith.constant 0 : index
    %c0_0 = arith.constant 0 : index
    %0 = vector.load %arg2[%c0, %c0_0] : memref<16x72xf32, #tpu.memory_space<vmem>>, vector<16x72xf32>
    %c0_1 = arith.constant 0 : index
    %c0_2 = arith.constant 0 : index
    %1 = vector.load %arg1[%c0_1, %c0_2] : memref<72x256xf32, #tpu.memory_space<vmem>>, vector<72x256xf32>
    %cst = arith.constant dense<0.000000e+00> : vector<16x256xf32>
    %2 = tpu.matmul %0, %1, %cst {dimension_numbers = #tpu.dot_dimension_numbers<[1], [0], [0], [1], [0, 0, 1, 1], [], []>} : vector<16x72xf32>, vector<72x256xf32>, vector<16x256xf32> -> vector<16x256xf32>
    %c0_3 = arith.constant 0 : index
    %c0_4 = arith.constant 0 : index
    %3 = vector.load %arg3[%c0_3, %c0_4] : memref<16x1xf32, #tpu.memory_space<vmem>>, vector<16x1xf32>
    %4 = vector.broadcast %3 : vector<16x1xf32> to vector<16x256xf32>
    %5 = arith.addf %2, %4 : vector<16x256xf32>
    %cst_5 = arith.constant 0.000000e+00 : f32
    %6 = vector.broadcast %cst_5 : f32 to vector<16x256xf32>
    %7 = arith.maximumf %5, %6 : vector<16x256xf32>
    %c0_6 = arith.constant 0 : index
    %c0_7 = arith.constant 0 : index
    %8 = vector.load %arg4[%c0_6, %c0_7] : memref<16x256xf32, #tpu.memory_space<vmem>>, vector<16x256xf32>
    tpu.vector_store %arg4[%c0_6, %c0_7], %7 {strides = array<i32>} : memref<16x256xf32, #tpu.memory_space<vmem>>, vector<16x256xf32>,
    return
  }
  func.func @transform_0(%arg0: i32) -> (i32, i32) {
    %c0_i32 = arith.constant 0 : i32
    %c0_i32_0 = arith.constant 0 : i32
    return %c0_i32, %arg0 : i32, i32
  }
  func.func @transform_1(%arg0: i32) -> (i32, i32) {
    %c0_i32 = arith.constant 0 : i32
    %c0_i32_0 = arith.constant 0 : i32
    %c0_i32_1 = arith.constant 0 : i32
    return %c0_i32, %c0_i32_0 : i32, i32
  }
  func.func @transform_2(%arg0: i32) -> (i32, i32) {
    %c0_i32 = arith.constant 0 : i32
    %c0_i32_0 = arith.constant 0 : i32
    %c0_i32_1 = arith.constant 0 : i32
    return %c0_i32, %c0_i32_0 : i32, i32
  }
  func.func @transform_3(%arg0: i32) -> (i32, i32) {
    %c0_i32 = arith.constant 0 : i32
    %c0_i32_0 = arith.constant 0 : i32
    return %c0_i32, %arg0 : i32, i32
  }
}

module attributes {stable_mosaic.version = 11 : i64} {
  func.func @_conv_relu_kernel(%arg0: i32, %arg1: memref<144x128xf32, #tpu.memory_space<vmem>>, %arg2: memref<16x144xf32, #tpu.memory_space<vmem>>, %arg3: memref<16x1xf32, #tpu.memory_space<vmem>>, %arg4: memref<16x128xf32, #tpu.memory_space<vmem>>) attributes {dimension_semantics = [#tpu.dimension_semantics<parallel>], iteration_bounds = array<i64: 1>, scalar_prefetch = 0 : i64, scratch_operands = 0 : i64, tpu.core_type = #tpu.core_type<tc>, window_params = [{transform_indices = @transform_0, window_bounds = array<i64: 144, 128>}, {pipeline_mode = #tpu.pipeline_mode<synchronous>, transform_indices = @transform_1, window_bounds = array<i64: 16, 144>}, {pipeline_mode = #tpu.pipeline_mode<synchronous>, transform_indices = @transform_2, window_bounds = array<i64: 16, 1>}, {transform_indices = @transform_3, window_bounds = array<i64: 16, 128>}]} {
    %c0 = arith.constant 0 : index
    %c0_0 = arith.constant 0 : index
    %0 = vector.load %arg2[%c0, %c0_0] : memref<16x144xf32, #tpu.memory_space<vmem>>, vector<16x144xf32>
    %c0_1 = arith.constant 0 : index
    %c0_2 = arith.constant 0 : index
    %1 = vector.load %arg1[%c0_1, %c0_2] : memref<144x128xf32, #tpu.memory_space<vmem>>, vector<144x128xf32>
    %cst = arith.constant dense<0.000000e+00> : vector<16x128xf32>
    %2 = tpu.matmul %0, %1, %cst {dimension_numbers = #tpu.dot_dimension_numbers<[1], [0], [0], [1], [0, 0, 1, 1], [], []>} : vector<16x144xf32>, vector<144x128xf32>, vector<16x128xf32> -> vector<16x128xf32>
    %c0_3 = arith.constant 0 : index
    %c0_4 = arith.constant 0 : index
    %3 = vector.load %arg3[%c0_3, %c0_4] : memref<16x1xf32, #tpu.memory_space<vmem>>, vector<16x1xf32>
    %4 = vector.broadcast %3 : vector<16x1xf32> to vector<16x128xf32>
    %5 = arith.addf %2, %4 : vector<16x128xf32>
    %cst_5 = arith.constant 0.000000e+00 : f32
    %6 = vector.broadcast %cst_5 : f32 to vector<16x128xf32>
    %7 = arith.maximumf %5, %6 : vector<16x128xf32>
    %c0_6 = arith.constant 0 : index
    %c0_7 = arith.constant 0 : index
    %8 = vector.load %arg4[%c0_6, %c0_7] : memref<16x128xf32, #tpu.memory_space<vmem>>, vector<16x128xf32>
    tpu.vector_store %arg4[%c0_6, %c0_7], %7 {strides = array<i32>} : memref<16x128xf32, #tpu.memory_space<vmem>>, vector<16x128xf32>,
    return
  }
  func.func @transform_0(%arg0: i32) -> (i32, i32) {
    %c0_i32 = arith.constant 0 : i32
    %c0_i32_0 = arith.constant 0 : i32
    return %c0_i32, %arg0 : i32, i32
  }
  func.func @transform_1(%arg0: i32) -> (i32, i32) {
    %c0_i32 = arith.constant 0 : i32
    %c0_i32_0 = arith.constant 0 : i32
    %c0_i32_1 = arith.constant 0 : i32
    return %c0_i32, %c0_i32_0 : i32, i32
  }
  func.func @transform_2(%arg0: i32) -> (i32, i32) {
    %c0_i32 = arith.constant 0 : i32
    %c0_i32_0 = arith.constant 0 : i32
    %c0_i32_1 = arith.constant 0 : i32
    return %c0_i32, %c0_i32_0 : i32, i32
  }
  func.func @transform_3(%arg0: i32) -> (i32, i32) {
    %c0_i32 = arith.constant 0 : i32
    %c0_i32_0 = arith.constant 0 : i32
    return %c0_i32, %arg0 : i32, i32
  }
}

module attributes {stable_mosaic.version = 11 : i64} {
  func.func @_tail_kernel(%arg0: i32, %arg1: memref<32x144xf32, #tpu.memory_space<vmem>>, %arg2: memref<144x16xf32, #tpu.memory_space<vmem>>, %arg3: memref<1x16xf32, #tpu.memory_space<vmem>>, %arg4: memref<256x32xf32, #tpu.memory_space<vmem>>, %arg5: memref<1x32xf32, #tpu.memory_space<vmem>>, %arg6: memref<32x10xf32, #tpu.memory_space<vmem>>, %arg7: memref<1x10xf32, #tpu.memory_space<vmem>>, %arg8: memref<2x10xf32, #tpu.memory_space<vmem>>) attributes {dimension_semantics = [#tpu.dimension_semantics<arbitrary>], iteration_bounds = array<i64: 1>, scalar_prefetch = 0 : i64, scratch_operands = 0 : i64, tpu.core_type = #tpu.core_type<tc>, window_params = [{pipeline_mode = #tpu.pipeline_mode<synchronous>, transform_indices = @transform_0, window_bounds = array<i64: 32, 144>}, {pipeline_mode = #tpu.pipeline_mode<synchronous>, transform_indices = @transform_1, window_bounds = array<i64: 144, 16>}, {pipeline_mode = #tpu.pipeline_mode<synchronous>, transform_indices = @transform_2, window_bounds = array<i64: 1, 16>}, {pipeline_mode = #tpu.pipeline_mode<synchronous>, transform_indices = @transform_3, window_bounds = array<i64: 256, 32>}, {pipeline_mode = #tpu.pipeline_mode<synchronous>, transform_indices = @transform_4, window_bounds = array<i64: 1, 32>}, {pipeline_mode = #tpu.pipeline_mode<synchronous>, transform_indices = @transform_5, window_bounds = array<i64: 32, 10>}, {pipeline_mode = #tpu.pipeline_mode<synchronous>, transform_indices = @transform_6, window_bounds = array<i64: 1, 10>}, {pipeline_mode = #tpu.pipeline_mode<synchronous>, transform_indices = @transform_7, window_bounds = array<i64: 2, 10>}]} {
    %c0 = arith.constant 0 : index
    %c0_0 = arith.constant 0 : index
    %0 = vector.load %arg1[%c0, %c0_0] : memref<32x144xf32, #tpu.memory_space<vmem>>, vector<32x144xf32>
    %c0_1 = arith.constant 0 : index
    %c0_2 = arith.constant 0 : index
    %1 = vector.load %arg2[%c0_1, %c0_2] : memref<144x16xf32, #tpu.memory_space<vmem>>, vector<144x16xf32>
    %cst = arith.constant dense<0.000000e+00> : vector<32x16xf32>
    %2 = tpu.matmul %0, %1, %cst {dimension_numbers = #tpu.dot_dimension_numbers<[1], [0], [0], [1], [0, 0, 1, 1], [], []>} : vector<32x144xf32>, vector<144x16xf32>, vector<32x16xf32> -> vector<32x16xf32>
    %c0_3 = arith.constant 0 : index
    %c0_4 = arith.constant 0 : index
    %3 = vector.load %arg3[%c0_3, %c0_4] : memref<1x16xf32, #tpu.memory_space<vmem>>, vector<1x16xf32>
    %4 = vector.broadcast %3 : vector<1x16xf32> to vector<32x16xf32>
    %5 = arith.addf %2, %4 : vector<32x16xf32>
    %cst_5 = arith.constant 0.000000e+00 : f32
    %6 = vector.broadcast %cst_5 : f32 to vector<32x16xf32>
    %7 = arith.maximumf %5, %6 : vector<32x16xf32>
    %8 = vector.extract_strided_slice %7 {offsets = [0, 0], sizes = [1, 16], strides = [1, 1]} : vector<32x16xf32> to vector<1x16xf32>
    %9 = vector.extract_strided_slice %7 {offsets = [1, 0], sizes = [1, 16], strides = [1, 1]} : vector<32x16xf32> to vector<1x16xf32>
    %10 = vector.extract_strided_slice %7 {offsets = [2, 0], sizes = [1, 16], strides = [1, 1]} : vector<32x16xf32> to vector<1x16xf32>
    %11 = vector.extract_strided_slice %7 {offsets = [3, 0], sizes = [1, 16], strides = [1, 1]} : vector<32x16xf32> to vector<1x16xf32>
    %12 = vector.extract_strided_slice %7 {offsets = [4, 0], sizes = [1, 16], strides = [1, 1]} : vector<32x16xf32> to vector<1x16xf32>
    %13 = vector.extract_strided_slice %7 {offsets = [5, 0], sizes = [1, 16], strides = [1, 1]} : vector<32x16xf32> to vector<1x16xf32>
    %14 = vector.extract_strided_slice %7 {offsets = [6, 0], sizes = [1, 16], strides = [1, 1]} : vector<32x16xf32> to vector<1x16xf32>
    %15 = vector.extract_strided_slice %7 {offsets = [7, 0], sizes = [1, 16], strides = [1, 1]} : vector<32x16xf32> to vector<1x16xf32>
    %16 = vector.extract_strided_slice %7 {offsets = [8, 0], sizes = [1, 16], strides = [1, 1]} : vector<32x16xf32> to vector<1x16xf32>
    %17 = vector.extract_strided_slice %7 {offsets = [9, 0], sizes = [1, 16], strides = [1, 1]} : vector<32x16xf32> to vector<1x16xf32>
    %18 = vector.extract_strided_slice %7 {offsets = [10, 0], sizes = [1, 16], strides = [1, 1]} : vector<32x16xf32> to vector<1x16xf32>
    %19 = vector.extract_strided_slice %7 {offsets = [11, 0], sizes = [1, 16], strides = [1, 1]} : vector<32x16xf32> to vector<1x16xf32>
    %20 = vector.extract_strided_slice %7 {offsets = [12, 0], sizes = [1, 16], strides = [1, 1]} : vector<32x16xf32> to vector<1x16xf32>
    %21 = vector.extract_strided_slice %7 {offsets = [13, 0], sizes = [1, 16], strides = [1, 1]} : vector<32x16xf32> to vector<1x16xf32>
    %22 = vector.extract_strided_slice %7 {offsets = [14, 0], sizes = [1, 16], strides = [1, 1]} : vector<32x16xf32> to vector<1x16xf32>
    %23 = vector.extract_strided_slice %7 {offsets = [15, 0], sizes = [1, 16], strides = [1, 1]} : vector<32x16xf32> to vector<1x16xf32>
    %24 = tpu.concatenate %8, %9, %10, %11, %12, %13, %14, %15, %16, %17, %18, %19, %20, %21, %22, %23 in 1 : vector<1x16xf32>, vector<1x16xf32>, vector<1x16xf32>, vector<1x16xf32>, vector<1x16xf32>, vector<1x16xf32>, vector<1x16xf32>, vector<1x16xf32>, vector<1x16xf32>, vector<1x16xf32>, vector<1x16xf32>, vector<1x16xf32>, vector<1x16xf32>, vector<1x16xf32>, vector<1x16xf32>, vector<1x16xf32> -> vector<1x256xf32>
    %25 = vector.extract_strided_slice %7 {offsets = [16, 0], sizes = [1, 16], strides = [1, 1]} : vector<32x16xf32> to vector<1x16xf32>
    %26 = vector.extract_strided_slice %7 {offsets = [17, 0], sizes = [1, 16], strides = [1, 1]} : vector<32x16xf32> to vector<1x16xf32>
    %27 = vector.extract_strided_slice %7 {offsets = [18, 0], sizes = [1, 16], strides = [1, 1]} : vector<32x16xf32> to vector<1x16xf32>
    %28 = vector.extract_strided_slice %7 {offsets = [19, 0], sizes = [1, 16], strides = [1, 1]} : vector<32x16xf32> to vector<1x16xf32>
    %29 = vector.extract_strided_slice %7 {offsets = [20, 0], sizes = [1, 16], strides = [1, 1]} : vector<32x16xf32> to vector<1x16xf32>
    %30 = vector.extract_strided_slice %7 {offsets = [21, 0], sizes = [1, 16], strides = [1, 1]} : vector<32x16xf32> to vector<1x16xf32>
    %31 = vector.extract_strided_slice %7 {offsets = [22, 0], sizes = [1, 16], strides = [1, 1]} : vector<32x16xf32> to vector<1x16xf32>
    %32 = vector.extract_strided_slice %7 {offsets = [23, 0], sizes = [1, 16], strides = [1, 1]} : vector<32x16xf32> to vector<1x16xf32>
    %33 = vector.extract_strided_slice %7 {offsets = [24, 0], sizes = [1, 16], strides = [1, 1]} : vector<32x16xf32> to vector<1x16xf32>
    %34 = vector.extract_strided_slice %7 {offsets = [25, 0], sizes = [1, 16], strides = [1, 1]} : vector<32x16xf32> to vector<1x16xf32>
    %35 = vector.extract_strided_slice %7 {offsets = [26, 0], sizes = [1, 16], strides = [1, 1]} : vector<32x16xf32> to vector<1x16xf32>
    %36 = vector.extract_strided_slice %7 {offsets = [27, 0], sizes = [1, 16], strides = [1, 1]} : vector<32x16xf32> to vector<1x16xf32>
    %37 = vector.extract_strided_slice %7 {offsets = [28, 0], sizes = [1, 16], strides = [1, 1]} : vector<32x16xf32> to vector<1x16xf32>
    %38 = vector.extract_strided_slice %7 {offsets = [29, 0], sizes = [1, 16], strides = [1, 1]} : vector<32x16xf32> to vector<1x16xf32>
    %39 = vector.extract_strided_slice %7 {offsets = [30, 0], sizes = [1, 16], strides = [1, 1]} : vector<32x16xf32> to vector<1x16xf32>
    %40 = vector.extract_strided_slice %7 {offsets = [31, 0], sizes = [1, 16], strides = [1, 1]} : vector<32x16xf32> to vector<1x16xf32>
    %41 = tpu.concatenate %25, %26, %27, %28, %29, %30, %31, %32, %33, %34, %35, %36, %37, %38, %39, %40 in 1 : vector<1x16xf32>, vector<1x16xf32>, vector<1x16xf32>, vector<1x16xf32>, vector<1x16xf32>, vector<1x16xf32>, vector<1x16xf32>, vector<1x16xf32>, vector<1x16xf32>, vector<1x16xf32>, vector<1x16xf32>, vector<1x16xf32>, vector<1x16xf32>, vector<1x16xf32>, vector<1x16xf32>, vector<1x16xf32> -> vector<1x256xf32>
    %42 = tpu.concatenate %24, %41 in 0 : vector<1x256xf32>, vector<1x256xf32> -> vector<2x256xf32>
    %c0_6 = arith.constant 0 : index
    %c0_7 = arith.constant 0 : index
    %43 = vector.load %arg4[%c0_6, %c0_7] : memref<256x32xf32, #tpu.memory_space<vmem>>, vector<256x32xf32>
    %cst_8 = arith.constant dense<0.000000e+00> : vector<2x32xf32>
    %44 = tpu.matmul %42, %43, %cst_8 {dimension_numbers = #tpu.dot_dimension_numbers<[1], [0], [0], [1], [0, 0, 1, 1], [], []>} : vector<2x256xf32>, vector<256x32xf32>, vector<2x32xf32> -> vector<2x32xf32>
    %c0_9 = arith.constant 0 : index
    %c0_10 = arith.constant 0 : index
    %45 = vector.load %arg5[%c0_9, %c0_10] : memref<1x32xf32, #tpu.memory_space<vmem>>, vector<1x32xf32>
    %46 = vector.broadcast %45 : vector<1x32xf32> to vector<2x32xf32>
    %47 = arith.addf %44, %46 : vector<2x32xf32>
    %cst_11 = arith.constant 0.000000e+00 : f32
    %48 = vector.broadcast %cst_11 : f32 to vector<2x32xf32>
    %49 = arith.maximumf %47, %48 : vector<2x32xf32>
    %c0_12 = arith.constant 0 : index
    %c0_13 = arith.constant 0 : index
    %50 = vector.load %arg6[%c0_12, %c0_13] : memref<32x10xf32, #tpu.memory_space<vmem>>, vector<32x10xf32>
    %cst_14 = arith.constant dense<0.000000e+00> : vector<2x10xf32>
    %51 = tpu.matmul %49, %50, %cst_14 {dimension_numbers = #tpu.dot_dimension_numbers<[1], [0], [0], [1], [0, 0, 1, 1], [], []>} : vector<2x32xf32>, vector<32x10xf32>, vector<2x10xf32> -> vector<2x10xf32>
    %c0_15 = arith.constant 0 : index
    %c0_16 = arith.constant 0 : index
    %52 = vector.load %arg7[%c0_15, %c0_16] : memref<1x10xf32, #tpu.memory_space<vmem>>, vector<1x10xf32>
    %53 = vector.broadcast %52 : vector<1x10xf32> to vector<2x10xf32>
    %54 = arith.addf %51, %53 : vector<2x10xf32>
    %cst_17 = arith.constant dense<0xFF800000> : vector<2xf32>
    %55 = vector.multi_reduction <maximumf>, %54, %cst_17 [1] : vector<2x10xf32> to vector<2xf32>
    %56 = vector.shape_cast %55 : vector<2xf32> to vector<2x1xf32>
    %57 = vector.broadcast %56 : vector<2x1xf32> to vector<2x10xf32>
    %58 = arith.subf %54, %57 : vector<2x10xf32>
    %59 = math.exp %58 : vector<2x10xf32>
    %cst_18 = arith.constant dense<0.000000e+00> : vector<2xf32>
    %60 = vector.multi_reduction <add>, %59, %cst_18 [1] : vector<2x10xf32> to vector<2xf32>
    %61 = vector.shape_cast %60 : vector<2xf32> to vector<2x1xf32>
    %62 = math.log %61 : vector<2x1xf32>
    %63 = arith.addf %56, %62 : vector<2x1xf32>
    %64 = vector.broadcast %63 : vector<2x1xf32> to vector<2x10xf32>
    %65 = arith.subf %54, %64 : vector<2x10xf32>
    %c0_19 = arith.constant 0 : index
    %c0_20 = arith.constant 0 : index
    %66 = vector.load %arg8[%c0_19, %c0_20] : memref<2x10xf32, #tpu.memory_space<vmem>>, vector<2x10xf32>
    tpu.vector_store %arg8[%c0_19, %c0_20], %65 {strides = array<i32>} : memref<2x10xf32, #tpu.memory_space<vmem>>, vector<2x10xf32>,
    return
  }
  func.func @transform_0(%arg0: i32) -> (i32, i32) {
    %c0_i32 = arith.constant 0 : i32
    %c0_i32_0 = arith.constant 0 : i32
    %c0_i32_1 = arith.constant 0 : i32
    return %c0_i32, %c0_i32_0 : i32, i32
  }
  func.func @transform_1(%arg0: i32) -> (i32, i32) {
    %c0_i32 = arith.constant 0 : i32
    %c0_i32_0 = arith.constant 0 : i32
    %c0_i32_1 = arith.constant 0 : i32
    return %c0_i32, %c0_i32_0 : i32, i32
  }
  func.func @transform_2(%arg0: i32) -> (i32, i32) {
    %c0_i32 = arith.constant 0 : i32
    %c0_i32_0 = arith.constant 0 : i32
    %c0_i32_1 = arith.constant 0 : i32
    return %c0_i32, %c0_i32_0 : i32, i32
  }
  func.func @transform_3(%arg0: i32) -> (i32, i32) {
    %c0_i32 = arith.constant 0 : i32
    %c0_i32_0 = arith.constant 0 : i32
    %c0_i32_1 = arith.constant 0 : i32
    return %c0_i32, %c0_i32_0 : i32, i32
  }
  func.func @transform_4(%arg0: i32) -> (i32, i32) {
    %c0_i32 = arith.constant 0 : i32
    %c0_i32_0 = arith.constant 0 : i32
    %c0_i32_1 = arith.constant 0 : i32
    return %c0_i32, %c0_i32_0 : i32, i32
  }
  func.func @transform_5(%arg0: i32) -> (i32, i32) {
    %c0_i32 = arith.constant 0 : i32
    %c0_i32_0 = arith.constant 0 : i32
    %c0_i32_1 = arith.constant 0 : i32
    return %c0_i32, %c0_i32_0 : i32, i32
  }
  func.func @transform_6(%arg0: i32) -> (i32, i32) {
    %c0_i32 = arith.constant 0 : i32
    %c0_i32_0 = arith.constant 0 : i32
    %c0_i32_1 = arith.constant 0 : i32
    return %c0_i32, %c0_i32_0 : i32, i32
  }
  func.func @transform_7(%arg0: i32) -> (i32, i32) {
    %c0_i32 = arith.constant 0 : i32
    %c0_i32_0 = arith.constant 0 : i32
    %c0_i32_1 = arith.constant 0 : i32
    return %c0_i32, %c0_i32_0 : i32, i32
  }
}

</mosaic_0001>

<llo_original>
// kernel: net_forward.4
$region0: #{net_forward.4}
  #allocation0 [shape = 'u32[]', space=smem, size = 0x4, offset = 0x4, fixed_abs, tag = 'smem constant byte address 0x4 - core index']
  #allocation1 [shape = 'u32[72,128]{1,0:T(1,128)}', space=vmem, size = 0x9000, scoped, tag = 'internal scratch']
  %s0 = inlined_call_operand.vmem [shape: f32[27,2048], index: 0, kind: input, shape index: {}]
  %s1 = inlined_call_operand.vmem [shape: f32[8,27], index: 1, kind: input, shape index: {}]
  %s2 = inlined_call_operand.vmem [shape: f32[8,1], index: 2, kind: input, shape index: {}]
  %s3 = inlined_call_operand.vmem [shape: f32[8,1], index: 3, kind: input, shape index: {}]
  %s4 = inlined_call_operand.vmem [shape: f32[8,1], index: 4, kind: input, shape index: {}]
  %s5 = inlined_call_operand.vmem [shape: f32[8,2048], index: 5, kind: output, shape index: {}]
  %s6 = sld [smem:[#allocation0]]
  $region30: #{net_forward.4} parent=0
    _
  %s8 = ssub.s32 1, %s6
  %s9 = scalar_select 0, %s8, %s6
  // Predicated region
  $region2: #{net_forward.4} parent=0 // pred_check
    _
  $region3: #{net_forward.4} parent=0 // pred_check_branch
    %11 = sbr.rel (0) target = $region5
  $region4: #{net_forward.4} parent=0 // pred_region
    _
  $region5: #{net_forward.4} parent=0 // pred_fallthru
    _
  // Predicated region
  $region6: #{net_forward.4} parent=0 // pred_check
    _
  $region7: #{net_forward.4} parent=0 // pred_check_branch
    %13 = sbr.rel (0) target = $region9
  $region8: #{net_forward.4} parent=0 // pred_region
    _
  $region9: #{net_forward.4} parent=0 // pred_fallthru
    _
  // Predicated region
  $region10: #{net_forward.4} parent=0 // pred_check
    _
  $region11: #{net_forward.4} parent=0 // pred_check_branch
    %15 = sbr.rel (0) target = $region13
  $region12: #{net_forward.4} parent=0 // pred_region
    _
  $region13: #{net_forward.4} parent=0 // pred_fallthru
    _
  // Predicated region
  $region14: #{net_forward.4} parent=0 // pred_check
    _
  $region15: #{net_forward.4} parent=0 // pred_check_branch
    %17 = sbr.rel (0) target = $region17
  $region16: #{net_forward.4} parent=0 // pred_region
    _
  $region17: #{net_forward.4} parent=0 // pred_fallthru
    _
  // Predicated region
  $region18: #{net_forward.4} parent=0 // pred_check
    _
  $region19: #{net_forward.4} parent=0 // pred_check_branch
    %19 = sbr.rel (0) target = $region21
  $region20: #{net_forward.4} parent=0 // pred_region
    _
  $region21: #{net_forward.4} parent=0 // pred_fallthru
    _
  %v20 = vld [vmem:[%s1] sm:$0xff]
  %v21 = vld [vmem:[%s0] sm:$0xff]
  %v22 = vld [vmem:[%s0 + $0x8] sm:$0xff]
  %v23 = vld [vmem:[%s0 + $0x10] sm:$0xff]
  %v24 = vld [vmem:[%s0 + $0x18] sm:$0xff]
  %v25 = vld [vmem:[%s0 + $0x20] sm:$0xff]
  %v26 = vld [vmem:[%s0 + $0x28] sm:$0xff]
  %v27 = vld [vmem:[%s0 + $0x30] sm:$0xff]
  %v28 = vld [vmem:[%s0 + $0x38] sm:$0xff]
  %v29 = vld [vmem:[%s0 + $0x40] sm:$0xff]
  %v30 = vld [vmem:[%s0 + $0x48] sm:$0xff]
  %v31 = vld [vmem:[%s0 + $0x50] sm:$0xff]
  %v32 = vld [vmem:[%s0 + $0x58] sm:$0xff]
  %v33 = vld [vmem:[%s0 + $0x60] sm:$0xff]
  %v34 = vld [vmem:[%s0 + $0x68] sm:$0xff]
  %v35 = vld [vmem:[%s0 + $0x70] sm:$0xff]
  %v36 = vld [vmem:[%s0 + $0x78] sm:$0xff]
  %v37 = vld [vmem:[%s0 + $0x80] sm:$0xff]
  %v38 = vld [vmem:[%s0 + $0x88] sm:$0xff]
  %v39 = vld [vmem:[%s0 + $0x90] sm:$0xff]
  %v40 = vld [vmem:[%s0 + $0x98] sm:$0xff]
  %v41 = vld [vmem:[%s0 + $0xa0] sm:$0xff]
  %v42 = vld [vmem:[%s0 + $0xa8] sm:$0xff]
  %v43 = vld [vmem:[%s0 + $0xb0] sm:$0xff]
  %v44 = vld [vmem:[%s0 + $0xb8] sm:$0xff]
  %v45 = vld [vmem:[%s0 + $0xc0] sm:$0xff]
  %v46 = vld [vmem:[%s0 + $0xc8] sm:$0xff]
  %v47 = vld [vmem:[%s0 + $0xd0] sm:$0xff]
  %v48 = vld [vmem:[%s0 + $0xd8] sm:$0xff]
  %v49 = vld [vmem:[%s0 + $0xe0] sm:$0xff]
  %v50 = vld [vmem:[%s0 + $0xe8] sm:$0xff]
  %v51 = vld [vmem:[%s0 + $0xf0] sm:$0xff]
  %v52 = vld [vmem:[%s0 + $0xf8] sm:$0xff]
  %v53 = vld [vmem:[%s0 + $0x100] sm:$0xff]
  %v54 = vld [vmem:[%s0 + $0x108] sm:$0xff]
  %v55 = vld [vmem:[%s0 + $0x110] sm:$0xff]
  %v56 = vld [vmem:[%s0 + $0x118] sm:$0xff]
  %v57 = vld [vmem:[%s0 + $0x120] sm:$0xff]
  %v58 = vld [vmem:[%s0 + $0x128] sm:$0xff]
  %v59 = vld [vmem:[%s0 + $0x130] sm:$0xff]
  %v60 = vld [vmem:[%s0 + $0x138] sm:$0xff]
  %v61 = vld [vmem:[%s0 + $0x140] sm:$0xff]
  %v62 = vld [vmem:[%s0 + $0x148] sm:$0xff]
  %v63 = vld [vmem:[%s0 + $0x150] sm:$0xff]
  %v64 = vld [vmem:[%s0 + $0x158] sm:$0xff]
  %v65 = vld [vmem:[%s0 + $0x160] sm:$0xff]
  %v66 = vld [vmem:[%s0 + $0x168] sm:$0xff]
  %v67 = vld [vmem:[%s0 + $0x170] sm:$0xff]
  %v68 = vld [vmem:[%s0 + $0x178] sm:$0xff]
  %v69 = vld [vmem:[%s0 + $0x180] sm:$0x7]
  %v70 = vld [vmem:[%s0 + $0x188] sm:$0x7]
  %v71 = vld [vmem:[%s0 + $0x190] sm:$0x7]
  %v72 = vld [vmem:[%s0 + $0x198] sm:$0x7]
  %v73 = vld [vmem:[%s0 + $0x1a0] sm:$0x7]
  %v74 = vld [vmem:[%s0 + $0x1a8] sm:$0x7]
  %v75 = vld [vmem:[%s0 + $0x1b0] sm:$0x7]
  %v76 = vld [vmem:[%s0 + $0x1b8] sm:$0x7]
  %v77 = vld [vmem:[%s0 + $0x1c0] sm:$0x7]
  %v78 = vld [vmem:[%s0 + $0x1c8] sm:$0x7]
  %v79 = vld [vmem:[%s0 + $0x1d0] sm:$0x7]
  %v80 = vld [vmem:[%s0 + $0x1d8] sm:$0x7]
  %v81 = vld [vmem:[%s0 + $0x1e0] sm:$0x7]
  %v82 = vld [vmem:[%s0 + $0x1e8] sm:$0x7]
  %v83 = vld [vmem:[%s0 + $0x1f0] sm:$0x7]
  %v84 = vld [vmem:[%s0 + $0x1f8] sm:$0x7]
  %v85 = vld [vmem:[%s2] sm:$0xff]
  %87 = vset.pattern.permute.xlu0 0
  %88 = vperm.xlu0 %87, %v85
  %v89 = vpop.permute.xlu0 %88
  %vm91 = vcmask 220160
  %v93 = vsel %vm91, %v20, 0
  %vm95 = vcmask 1042432
  %v97 = vsel %vm95, %v69, 0
  %v100 = vsel %vm95, %v70, 0
  %v103 = vsel %vm95, %v71, 0
  %v106 = vsel %vm95, %v72, 0
  %v109 = vsel %vm95, %v73, 0
  %v112 = vsel %vm95, %v74, 0
  %v115 = vsel %vm95, %v75, 0
  %v118 = vsel %vm95, %v76, 0
  %v121 = vsel %vm95, %v77, 0
  %v124 = vsel %vm95, %v78, 0
  %v127 = vsel %vm95, %v79, 0
  %v130 = vsel %vm95, %v80, 0
  %v133 = vsel %vm95, %v81, 0
  %v136 = vsel %vm95, %v82, 0
  %v139 = vsel %vm95, %v83, 0
  %v142 = vsel %vm95, %v84, 0
  %144 = vmatpush.msra.mxu0 0.0
  %145 = vmatpush.msra.mxu0 0.0
  %146 = vmatpush.msra.mxu0 0.0
  %147 = vmatpush.msra.mxu0 0.0
  %148 = vmatpush.msra.mxu0 0.0
  %149 = vmatpush.msra.mxu0 0.0
  %150 = vmatpush.msra.mxu0 0.0
  %151 = vmatpush.msra.mxu0 0.0
  %152 = vmatpush.msra.mxu0 0.0
  %153 = vmatpush.msra.mxu0 0.0
  %154 = vmatpush.msra.mxu0 0.0
  %155 = vmatpush.msra.mxu0 0.0
  %156 = vmatpush.msra.mxu0 %v97
  %157 = vmatpush.msra.mxu0 %v53
  %158 = vmatpush.msra.mxu0 %v37
  %159 = vmatpush.msra.mxu0 %v21
  %160 = vmatmul.f32.gmra.mxu0 %v93
  %v161 = vpop.f32.mrf.mxu0
  %v162 = vadd.f32 %v89, %v161
  %163 = vdwg.mxu0
  %164 = vmatpush.msra.mxu0 0.0
  %165 = vmatpush.msra.mxu0 0.0
  %166 = vmatpush.msra.mxu0 0.0
  %167 = vmatpush.msra.mxu0 0.0
  %168 = vmatpush.msra.mxu0 0.0
  %169 = vmatpush.msra.mxu0 0.0
  %170 = vmatpush.msra.mxu0 0.0
  %171 = vmatpush.msra.mxu0 0.0
  %172 = vmatpush.msra.mxu0 0.0
  %173 = vmatpush.msra.mxu0 0.0
  %174 = vmatpush.msra.mxu0 0.0
  %175 = vmatpush.msra.mxu0 0.0
  %176 = vmatpush.msra.mxu0 %v100
  %177 = vmatpush.msra.mxu0 %v54
  %178 = vmatpush.msra.mxu0 %v38
  %179 = vmatpush.msra.mxu0 %v22
  %180 = vmatmul.f32.gmra.mxu0 %v93
  %v181 = vpop.f32.mrf.mxu0
  %v182 = vadd.f32 %v89, %v181
  %183 = vdwg.mxu0
  %184 = vmatpush.msra.mxu0 0.0
  %185 = vmatpush.msra.mxu0 0.0
  %186 = vmatpush.msra.mxu0 0.0
  %187 = vmatpush.msra.mxu0 0.0
  %188 = vmatpush.msra.mxu0 0.0
  %189 = vmatpush.msra.mxu0 0.0
  %190 = vmatpush.msra.mxu0 0.0
  %191 = vmatpush.msra.mxu0 0.0
  %192 = vmatpush.msra.mxu0 0.0
  %193 = vmatpush.msra.mxu0 0.0
  %194 = vmatpush.msra.mxu0 0.0
  %195 = vmatpush.msra.mxu0 0.0
  %196 = vmatpush.msra.mxu0 %v103
  %197 = vmatpush.msra.mxu0 %v55
  %198 = vmatpush.msra.mxu0 %v39
  %199 = vmatpush.msra.mxu0 %v23
  %200 = vmatmul.f32.gmra.mxu0 %v93
  %v201 = vpop.f32.mrf.mxu0
  %v202 = vadd.f32 %v89, %v201
  %203 = vdwg.mxu0
  %204 = vmatpush.msra.mxu0 0.0
  %205 = vmatpush.msra.mxu0 0.0
  %206 = vmatpush.msra.mxu0 0.0
  %207 = vmatpush.msra.mxu0 0.0
  %208 = vmatpush.msra.mxu0 0.0
  %209 = vmatpush.msra.mxu0 0.0
  %210 = vmatpush.msra.mxu0 0.0
  %211 = vmatpush.msra.mxu0 0.0
  %212 = vmatpush.msra.mxu0 0.0
  %213 = vmatpush.msra.mxu0 0.0
  %214 = vmatpush.msra.mxu0 0.0
  %215 = vmatpush.msra.mxu0 0.0
  %216 = vmatpush.msra.mxu0 %v106
  %217 = vmatpush.msra.mxu0 %v56
  %218 = vmatpush.msra.mxu0 %v40
  %219 = vmatpush.msra.mxu0 %v24
  %220 = vmatmul.f32.gmra.mxu0 %v93
  %v221 = vpop.f32.mrf.mxu0
  %v222 = vadd.f32 %v89, %v221
  %223 = vdwg.mxu0
  %224 = vmatpush.msra.mxu0 0.0
  %225 = vmatpush.msra.mxu0 0.0
  %226 = vmatpush.msra.mxu0 0.0
  %227 = vmatpush.msra.mxu0 0.0
  %228 = vmatpush.msra.mxu0 0.0
  %229 = vmatpush.msra.mxu0 0.0
  %230 = vmatpush.msra.mxu0 0.0
  %231 = vmatpush.msra.mxu0 0.0
  %232 = vmatpush.msra.mxu0 0.0
  %233 = vmatpush.msra.mxu0 0.0
  %234 = vmatpush.msra.mxu0 0.0
  %235 = vmatpush.msra.mxu0 0.0
  %236 = vmatpush.msra.mxu0 %v109
  %237 = vmatpush.msra.mxu0 %v57
  %238 = vmatpush.msra.mxu0 %v41
  %239 = vmatpush.msra.mxu0 %v25
  %240 = vmatmul.f32.gmra.mxu0 %v93
  %v241 = vpop.f32.mrf.mxu0
  %v242 = vadd.f32 %v89, %v241
  %243 = vdwg.mxu0
  %244 = vmatpush.msra.mxu0 0.0
  %245 = vmatpush.msra.mxu0 0.0
  %246 = vmatpush.msra.mxu0 0.0
  %247 = vmatpush.msra.mxu0 0.0
  %248 = vmatpush.msra.mxu0 0.0
  %249 = vmatpush.msra.mxu0 0.0
  %250 = vmatpush.msra.mxu0 0.0
  %251 = vmatpush.msra.mxu0 0.0
  %252 = vmatpush.msra.mxu0 0.0
  %253 = vmatpush.msra.mxu0 0.0
  %254 = vmatpush.msra.mxu0 0.0
  %255 = vmatpush.msra.mxu0 0.0
  %256 = vmatpush.msra.mxu0 %v112
  %257 = vmatpush.msra.mxu0 %v58
  %258 = vmatpush.msra.mxu0 %v42
  %259 = vmatpush.msra.mxu0 %v26
  %260 = vmatmul.f32.gmra.mxu0 %v93
  %v261 = vpop.f32.mrf.mxu0
  %v262 = vadd.f32 %v89, %v261
  %263 = vdwg.mxu0
  %264 = vmatpush.msra.mxu0 0.0
  %265 = vmatpush.msra.mxu0 0.0
  %266 = vmatpush.msra.mxu0 0.0
  %267 = vmatpush.msra.mxu0 0.0
  %268 = vmatpush.msra.mxu0 0.0
  %269 = vmatpush.msra.mxu0 0.0
  %270 = vmatpush.msra.mxu0 0.0
  %271 = vmatpush.msra.mxu0 0.0
  %272 = vmatpush.msra.mxu0 0.0
  %273 = vmatpush.msra.mxu0 0.0
  %274 = vmatpush.msra.mxu0 0.0
  %275 = vmatpush.msra.mxu0 0.0
  %276 = vmatpush.msra.mxu0 %v115
  %277 = vmatpush.msra.mxu0 %v59
  %278 = vmatpush.msra.mxu0 %v43
  %279 = vmatpush.msra.mxu0 %v27
  %280 = vmatmul.f32.gmra.mxu0 %v93
  %v281 = vpop.f32.mrf.mxu0
  %v282 = vadd.f32 %v89, %v281
  %283 = vdwg.mxu0
  %284 = vmatpush.msra.mxu0 0.0
  %285 = vmatpush.msra.mxu0 0.0
  %286 = vmatpush.msra.mxu0 0.0
  %287 = vmatpush.msra.mxu0 0.0
  %288 = vmatpush.msra.mxu0 0.0
  %289 = vmatpush.msra.mxu0 0.0
  %290 = vmatpush.msra.mxu0 0.0
  %291 = vmatpush.msra.mxu0 0.0
  %292 = vmatpush.msra.mxu0 0.0
  %293 = vmatpush.msra.mxu0 0.0
  %294 = vmatpush.msra.mxu0 0.0
  %295 = vmatpush.msra.mxu0 0.0
  %296 = vmatpush.msra.mxu0 %v118
  %297 = vmatpush.msra.mxu0 %v60
  %298 = vmatpush.msra.mxu0 %v44
  %299 = vmatpush.msra.mxu0 %v28
  %300 = vmatmul.f32.gmra.mxu0 %v93
  %v301 = vpop.f32.mrf.mxu0
  %v302 = vadd.f32 %v89, %v301
  %303 = vdwg.mxu0
  %304 = vmatpush.msra.mxu0 0.0
  %305 = vmatpush.msra.mxu0 0.0
  %306 = vmatpush.msra.mxu0 0.0
  %307 = vmatpush.msra.mxu0 0.0
  %308 = vmatpush.msra.mxu0 0.0
  %309 = vmatpush.msra.mxu0 0.0
  %310 = vmatpush.msra.mxu0 0.0
  %311 = vmatpush.msra.mxu0 0.0
  %312 = vmatpush.msra.mxu0 0.0
  %313 = vmatpush.msra.mxu0 0.0
  %314 = vmatpush.msra.mxu0 0.0
  %315 = vmatpush.msra.mxu0 0.0
  %316 = vmatpush.msra.mxu0 %v121
  %317 = vmatpush.msra.mxu0 %v61
  %318 = vmatpush.msra.mxu0 %v45
  %319 = vmatpush.msra.mxu0 %v29
  %320 = vmatmul.f32.gmra.mxu0 %v93
  %v321 = vpop.f32.mrf.mxu0
  %v322 = vadd.f32 %v89, %v321
  %323 = vdwg.mxu0
  %324 = vmatpush.msra.mxu0 0.0
  %325 = vmatpush.msra.mxu0 0.0
  %326 = vmatpush.msra.mxu0 0.0
  %327 = vmatpush.msra.mxu0 0.0
  %328 = vmatpush.msra.mxu0 0.0
  %329 = vmatpush.msra.mxu0 0.0
  %330 = vmatpush.msra.mxu0 0.0
  %331 = vmatpush.msra.mxu0 0.0
  %332 = vmatpush.msra.mxu0 0.0
  %333 = vmatpush.msra.mxu0 0.0
  %334 = vmatpush.msra.mxu0 0.0
  %335 = vmatpush.msra.mxu0 0.0
  %336 = vmatpush.msra.mxu0 %v124
  %337 = vmatpush.msra.mxu0 %v62
  %338 = vmatpush.msra.mxu0 %v46
  %339 = vmatpush.msra.mxu0 %v30
  %340 = vmatmul.f32.gmra.mxu0 %v93
  %v341 = vpop.f32.mrf.mxu0
  %v342 = vadd.f32 %v89, %v341
  %343 = vdwg.mxu0
  %344 = vmatpush.msra.mxu0 0.0
  %345 = vmatpush.msra.mxu0 0.0
  %346 = vmatpush.msra.mxu0 0.0
  %347 = vmatpush.msra.mxu0 0.0
  %348 = vmatpush.msra.mxu0 0.0
  %349 = vmatpush.msra.mxu0 0.0
  %350 = vmatpush.msra.mxu0 0.0
  %351 = vmatpush.msra.mxu0 0.0
  %352 = vmatpush.msra.mxu0 0.0
  %353 = vmatpush.msra.mxu0 0.0
  %354 = vmatpush.msra.mxu0 0.0
  %355 = vmatpush.msra.mxu0 0.0
  %356 = vmatpush.msra.mxu0 %v127
  %357 = vmatpush.msra.mxu0 %v63
  %358 = vmatpush.msra.mxu0 %v47
  %359 = vmatpush.msra.mxu0 %v31
  %360 = vmatmul.f32.gmra.mxu0 %v93
  %v361 = vpop.f32.mrf.mxu0
  %v362 = vadd.f32 %v89, %v361
  %363 = vdwg.mxu0
  %364 = vmatpush.msra.mxu0 0.0
  %365 = vmatpush.msra.mxu0 0.0
  %366 = vmatpush.msra.mxu0 0.0
  %367 = vmatpush.msra.mxu0 0.0
  %368 = vmatpush.msra.mxu0 0.0
  %369 = vmatpush.msra.mxu0 0.0
  %370 = vmatpush.msra.mxu0 0.0
  %371 = vmatpush.msra.mxu0 0.0
  %372 = vmatpush.msra.mxu0 0.0
  %373 = vmatpush.msra.mxu0 0.0
  %374 = vmatpush.msra.mxu0 0.0
  %375 = vmatpush.msra.mxu0 0.0
  %376 = vmatpush.msra.mxu0 %v130
  %377 = vmatpush.msra.mxu0 %v64
  %378 = vmatpush.msra.mxu0 %v48
  %379 = vmatpush.msra.mxu0 %v32
  %380 = vmatmul.f32.gmra.mxu0 %v93
  %v381 = vpop.f32.mrf.mxu0
  %v382 = vadd.f32 %v89, %v381
  %383 = vdwg.mxu0
  %384 = vmatpush.msra.mxu0 0.0
  %385 = vmatpush.msra.mxu0 0.0
  %386 = vmatpush.msra.mxu0 0.0
  %387 = vmatpush.msra.mxu0 0.0
  %388 = vmatpush.msra.mxu0 0.0
  %389 = vmatpush.msra.mxu0 0.0
  %390 = vmatpush.msra.mxu0 0.0
  %391 = vmatpush.msra.mxu0 0.0
  %392 = vmatpush.msra.mxu0 0.0
  %393 = vmatpush.msra.mxu0 0.0
  %394 = vmatpush.msra.mxu0 0.0
  %395 = vmatpush.msra.mxu0 0.0
  %396 = vmatpush.msra.mxu0 %v133
  %397 = vmatpush.msra.mxu0 %v65
  %398 = vmatpush.msra.mxu0 %v49
  %399 = vmatpush.msra.mxu0 %v33
  %400 = vmatmul.f32.gmra.mxu0 %v93
  %v401 = vpop.f32.mrf.mxu0
  %v402 = vadd.f32 %v89, %v401
  %403 = vdwg.mxu0
  %404 = vmatpush.msra.mxu0 0.0
  %405 = vmatpush.msra.mxu0 0.0
  %406 = vmatpush.msra.mxu0 0.0
  %407 = vmatpush.msra.mxu0 0.0
  %408 = vmatpush.msra.mxu0 0.0
  %409 = vmatpush.msra.mxu0 0.0
  %410 = vmatpush.msra.mxu0 0.0
  %411 = vmatpush.msra.mxu0 0.0
  %412 = vmatpush.msra.mxu0 0.0
  %413 = vmatpush.msra.mxu0 0.0
  %414 = vmatpush.msra.mxu0 0.0
  %415 = vmatpush.msra.mxu0 0.0
  %416 = vmatpush.msra.mxu0 %v136
  %417 = vmatpush.msra.mxu0 %v66
  %418 = vmatpush.msra.mxu0 %v50
  %419 = vmatpush.msra.mxu0 %v34
  %420 = vmatmul.f32.gmra.mxu0 %v93
  %v421 = vpop.f32.mrf.mxu0
  %v422 = vadd.f32 %v89, %v421
  %423 = vdwg.mxu0
  %424 = vmatpush.msra.mxu0 0.0
  %425 = vmatpush.msra.mxu0 0.0
  %426 = vmatpush.msra.mxu0 0.0
  %427 = vmatpush.msra.mxu0 0.0
  %428 = vmatpush.msra.mxu0 0.0
  %429 = vmatpush.msra.mxu0 0.0
  %430 = vmatpush.msra.mxu0 0.0
  %431 = vmatpush.msra.mxu0 0.0
  %432 = vmatpush.msra.mxu0 0.0
  %433 = vmatpush.msra.mxu0 0.0
  %434 = vmatpush.msra.mxu0 0.0
  %435 = vmatpush.msra.mxu0 0.0
  %436 = vmatpush.msra.mxu0 %v139
  %437 = vmatpush.msra.mxu0 %v67
  %438 = vmatpush.msra.mxu0 %v51
  %439 = vmatpush.msra.mxu0 %v35
  %440 = vmatmul.f32.gmra.mxu0 %v93
  %v441 = vpop.f32.mrf.mxu0
  %v442 = vadd.f32 %v89, %v441
  %443 = vdwg.mxu0
  %444 = vmatpush.msra.mxu0 0.0
  %445 = vmatpush.msra.mxu0 0.0
  %446 = vmatpush.msra.mxu0 0.0
  %447 = vmatpush.msra.mxu0 0.0
  %448 = vmatpush.msra.mxu0 0.0
  %449 = vmatpush.msra.mxu0 0.0
  %450 = vmatpush.msra.mxu0 0.0
  %451 = vmatpush.msra.mxu0 0.0
  %452 = vmatpush.msra.mxu0 0.0
  %453 = vmatpush.msra.mxu0 0.0
  %454 = vmatpush.msra.mxu0 0.0
  %455 = vmatpush.msra.mxu0 0.0
  %456 = vmatpush.msra.mxu0 %v142
  %457 = vmatpush.msra.mxu0 %v68
  %458 = vmatpush.msra.mxu0 %v52
  %459 = vmatpush.msra.mxu0 %v36
  %460 = vmatmul.f32.gmra.mxu0 %v93
  %v461 = vpop.f32.mrf.mxu0
  %v462 = vadd.f32 %v89, %v461
  %463 = vdwg.mxu0
  %v464 = vadd.f32 %v162, %v182
  %v465 = vadd.f32 %v464, %v202
  %v466 = vadd.f32 %v465, %v222
  %v467 = vadd.f32 %v466, %v242
  %v468 = vadd.f32 %v467, %v262
  %v469 = vadd.f32 %v468, %v282
  %v470 = vadd.f32 %v469, %v302
  %v471 = vadd.f32 %v470, %v322
  %v472 = vadd.f32 %v471, %v342
  %v473 = vadd.f32 %v472, %v362
  %v474 = vadd.f32 %v473, %v382
  %v475 = vadd.f32 %v474, %v402
  %v476 = vadd.f32 %v475, %v422
  %v477 = vadd.f32 %v476, %v442
  %v478 = vadd.f32 %v477, %v462
  %479 = vadd.xlane.f32.xlu0 %v478
  %v480 = vpop.xlane.xlu0 %479
  %v481 = vrcp.pop 2048.0
  %v482 = vmul.f32 2048.0, %v481
  %v483 = vsub.f32 1.0, %v482
  %v484 = vmul.f32 %v481, %v483
  %v485 = vadd.f32 %v481, %v484
  %vm486 = vweird.f32 %v481
  %v487 = vsel %vm486, %v481, %v485
  %v488 = vmul.f32 %v480, %v487
  %v489 = vsub.f32 %v162, %v488
  %v490 = vsub.f32 %v182, %v488
  %v491 = vsub.f32 %v202, %v488
  %v492 = vsub.f32 %v222, %v488
  %v493 = vsub.f32 %v242, %v488
  %v494 = vsub.f32 %v262, %v488
  %v495 = vsub.f32 %v282, %v488
  %v496 = vsub.f32 %v302, %v488
  %v497 = vsub.f32 %v322, %v488
  %v498 = vsub.f32 %v342, %v488
  %v499 = vsub.f32 %v362, %v488
  %v500 = vsub.f32 %v382, %v488
  %v501 = vsub.f32 %v402, %v488
  %v502 = vsub.f32 %v422, %v488
  %v503 = vsub.f32 %v442, %v488
  %v504 = vsub.f32 %v462, %v488
  %v505 = vmul.f32 %v489, %v489
  %v506 = vmul.f32 %v490, %v490
  %v507 = vmul.f32 %v491, %v491
  %v508 = vmul.f32 %v492, %v492
  %v509 = vmul.f32 %v493, %v493
  %v510 = vmul.f32 %v494, %v494
  %v511 = vmul.f32 %v495, %v495
  %v512 = vmul.f32 %v496, %v496
  %v513 = vmul.f32 %v497, %v497
  %v514 = vmul.f32 %v498, %v498
  %v515 = vmul.f32 %v499, %v499
  %v516 = vmul.f32 %v500, %v500
  %v517 = vmul.f32 %v501, %v501
  %v518 = vmul.f32 %v502, %v502
  %v519 = vmul.f32 %v503, %v503
  %v520 = vmul.f32 %v504, %v504
  %v521 = vadd.f32 %v505, %v506
  %v522 = vadd.f32 %v521, %v507
  %v523 = vadd.f32 %v522, %v508
  %v524 = vadd.f32 %v523, %v509
  %v525 = vadd.f32 %v524, %v510
  %v526 = vadd.f32 %v525, %v511
  %v527 = vadd.f32 %v526, %v512
  %v528 = vadd.f32 %v527, %v513
  %v529 = vadd.f32 %v528, %v514
  %v530 = vadd.f32 %v529, %v515
  %v531 = vadd.f32 %v530, %v516
  %v532 = vadd.f32 %v531, %v517
  %v533 = vadd.f32 %v532, %v518
  %v534 = vadd.f32 %v533, %v519
  %v535 = vadd.f32 %v534, %v520
  %536 = vadd.xlane.f32.xlu0 %v535
  %v537 = vpop.xlane.xlu0 %536
  %v538 = vmul.f32 %v537, %v487
  %v539 = vld [vmem:[%s3] sm:$0xff]
  %v540 = vadd.f32 %v538, 1e-05
  %v541 = vrsqrt.pop %v540
  %v542 = vmul.f32 %v541, %v540
  %v543 = vmul.f32 %v542, %v541
  %v544 = vmul.f32 0.5, %v543
  %v545 = vsub.f32 1.5, %v544
  %v546 = vmul.f32 %v541, %v545
  %vm547 = vweird.f32 %v540
  %vm548 = vweird.f32 %v541
  %vm549 = vmor %vm547, %vm548
  %v550 = vsel %vm549, %v541, %v546
  %v551 = vmul.f32 %v539, %v550
  %553 = vset.pattern.permute.xlu0 0
  %554 = vperm.xlu0 %553, %v551
  %v555 = vpop.permute.xlu0 %554
  %v557 = vmul.f32 %v489, %v555
  %v558 = vmul.f32 %v490, %v555
  %v559 = vmul.f32 %v491, %v555
  %v560 = vmul.f32 %v492, %v555
  %v561 = vmul.f32 %v493, %v555
  %v562 = vmul.f32 %v494, %v555
  %v563 = vmul.f32 %v495, %v555
  %v564 = vmul.f32 %v496, %v555
  %v565 = vmul.f32 %v497, %v555
  %v566 = vmul.f32 %v498, %v555
  %v567 = vmul.f32 %v499, %v555
  %v568 = vmul.f32 %v500, %v555
  %v569 = vmul.f32 %v501, %v555
  %v570 = vmul.f32 %v502, %v555
  %v571 = vmul.f32 %v503, %v555
  %v572 = vmul.f32 %v504, %v555
  %v573 = vld [vmem:[%s4] sm:$0xff]
  %575 = vset.pattern.permute.xlu0 0
  %576 = vperm.xlu0 %575, %v573
  %v577 = vpop.permute.xlu0 %576
  %v579 = vadd.f32 %v557, %v577
  %v580 = vadd.f32 %v558, %v577
  %v581 = vadd.f32 %v559, %v577
  %v582 = vadd.f32 %v560, %v577
  %v583 = vadd.f32 %v561, %v577
  %v584 = vadd.f32 %v562, %v577
  %v585 = vadd.f32 %v563, %v577
  %v586 = vadd.f32 %v564, %v577
  %v587 = vadd.f32 %v565, %v577
  %v588 = vadd.f32 %v566, %v577
  %v589 = vadd.f32 %v567, %v577
  %v590 = vadd.f32 %v568, %v577
  %v591 = vadd.f32 %v569, %v577
  %v592 = vadd.f32 %v570, %v577
  %v593 = vadd.f32 %v571, %v577
  %v594 = vadd.f32 %v572, %v577
  %v595 = vmax.f32 %v579, 0.0
  %v596 = vmax.f32 %v580, 0.0
  %v597 = vmax.f32 %v581, 0.0
  %v598 = vmax.f32 %v582, 0.0
  %v599 = vmax.f32 %v583, 0.0
  %v600 = vmax.f32 %v584, 0.0
  %v601 = vmax.f32 %v585, 0.0
  %v602 = vmax.f32 %v586, 0.0
  %v603 = vmax.f32 %v587, 0.0
  %v604 = vmax.f32 %v588, 0.0
  %v605 = vmax.f32 %v589, 0.0
  %v606 = vmax.f32 %v590, 0.0
  %v607 = vmax.f32 %v591, 0.0
  %v608 = vmax.f32 %v592, 0.0
  %v609 = vmax.f32 %v593, 0.0
  %v610 = vmax.f32 %v594, 0.0
  %611 = vst [vmem:[%s5] sm:$0xff] %v595
  %612 = vst [vmem:[%s5 + $0x8] sm:$0xff] %v596
  %613 = vst [vmem:[%s5 + $0x10] sm:$0xff] %v597
  %614 = vst [vmem:[%s5 + $0x18] sm:$0xff] %v598
  %615 = vst [vmem:[%s5 + $0x20] sm:$0xff] %v599
  %616 = vst [vmem:[%s5 + $0x28] sm:$0xff] %v600
  %617 = vst [vmem:[%s5 + $0x30] sm:$0xff] %v601
  %618 = vst [vmem:[%s5 + $0x38] sm:$0xff] %v602
  %619 = vst [vmem:[%s5 + $0x40] sm:$0xff] %v603
  %620 = vst [vmem:[%s5 + $0x48] sm:$0xff] %v604
  %621 = vst [vmem:[%s5 + $0x50] sm:$0xff] %v605
  %622 = vst [vmem:[%s5 + $0x58] sm:$0xff] %v606
  %623 = vst [vmem:[%s5 + $0x60] sm:$0xff] %v607
  %624 = vst [vmem:[%s5 + $0x68] sm:$0xff] %v608
  %625 = vst [vmem:[%s5 + $0x70] sm:$0xff] %v609
  %626 = vst [vmem:[%s5 + $0x78] sm:$0xff] %v610
  // Predicated region
  $region22: #{net_forward.4} parent=0 // pred_check
    _
  $region23: #{net_forward.4} parent=0 // pred_check_branch
    %628 = sbr.rel (0) target = $region25
  $region24: #{net_forward.4} parent=0 // pred_region
    _
  $region25: #{net_forward.4} parent=0 // pred_fallthru
    _
  // Predicated region
  $region26: #{net_forward.4} parent=0 // pred_check
    _
  $region27: #{net_forward.4} parent=0 // pred_check_branch
    %630 = sbr.rel (0) target = $region29
  $region28: #{net_forward.4} parent=0 // pred_region
    _
  $region29: #{net_forward.4} parent=0 // pred_fallthru
    _

// kernel: net_forward.5
$region0: #{net_forward.5}
  #allocation0 [shape = 'u32[]', space=smem, size = 0x4, offset = 0x4, fixed_abs, tag = 'smem constant byte address 0x4 - core index']
  #allocation1 [shape = 'u32[72,128]{1,0:T(1,128)}', space=vmem, size = 0x9000, scoped, tag = 'internal scratch']
  %s0 = inlined_call_operand.vmem [shape: f32[72,512], index: 0, kind: input, shape index: {}]
  %s1 = inlined_call_operand.vmem [shape: f32[16,72], index: 1, kind: input, shape index: {}]
  %s2 = inlined_call_operand.vmem [shape: f32[16,1], index: 2, kind: input, shape index: {}]
  %s3 = inlined_call_operand.vmem [shape: f32[16,512], index: 3, kind: output, shape index: {}]
  %s4 = sld [smem:[#allocation0]]
  $region87: #{net_forward.5} parent=0
    _
  %s6 = ssub.s32 1, %s4
  %s7 = scalar_select 0, %s6, %s4
  $region1: #{net_forward.5} parent=0
    #allocation2 [shape = 'u8[147456]{0}', space=vmem, size = 0x24000, scoped, tag = 'input window, operand 0']
    #allocation3 [shape = 'u8[32768]{0}', space=vmem, size = 0x8000, scoped, tag = 'output window, operand 0']
    loop: start=0, step=1, limit=4
    $region2: #{net_forward.5} parent=1 // loop_pre_header
      _
    $region3: #{net_forward.5} parent=1 // loop_header
      %s9 = sphi 0, %s13
      %p10 = scmp.ge.s32.totalorder %s9, 4
      %s19 = sphi 0, %s21
      %s22 = sphi 0, %s19
      %s23 = sphi 0, %s22
      %s39 = sphi 0, %s23
      %s43 = sphi 0, %s43
      %s45 = sphi 0, %s43
      %s46 = sphi 0, %s45
      %s60 = sphi 0, %s46
      %s64 = sphi 0, %s64
      %s66 = sphi 0, %s64
      %s67 = sphi 0, %s66
      %s81 = sphi 0, %s67
      %s87 = sphi 0, %s89
      %s90 = sphi 0, %s87
      %s91 = sphi 0, %s90
      %s107 = sphi 0, %s91
    $region4: #{net_forward.5} parent=1 // loop_header_branch
      %12 = sbr.rel (%p10) target = $region8
    $region5: #{net_forward.5} parent=1 // loop_body
      %s14 = ssub.s32 %s9, 1
      %s15 = ssub.s32 %s9, 2
      %s16 = sadd.s32 %s9, 1
      %s17 = ssub.s32 %s9, %s16
      %p18 = scmp.eq.s32.totalorder %s17, 0
      %s20 = sadd.s32 %s19, 1
      %s21 = scalar_select %p18, %s19, %s20
      %p24 = pneg %p18
      %p25 = scmp.eq.s32.totalorder %s9, 1
      %p26 = por %p24, %p25
      %p27 = scmp.ne.s32.totalorder %s19, %s22
      %p28 = scmp.eq.s32.totalorder %s9, 0
      %p29 = por %p27, %p28
      %p30 = scmp.ne.s32.totalorder %s19, %s22
      %p31 = scmp.eq.s32.totalorder %s14, 1
      %p32 = por %p30, %p31
      %p33 = scmp.ne.s32.totalorder %s22, %s23
      %p34 = scmp.eq.s32.totalorder %s14, 0
      %p35 = por %p33, %p34
      %p36 = scmp.ne.s32.totalorder %s22, %s23
      %p37 = scmp.eq.s32.totalorder %s15, 1
      %p38 = por %p36, %p37
      %p40 = scmp.ne.s32.totalorder %s23, %s39
      %p41 = scmp.eq.s32.totalorder %s15, 0
      %p42 = por %p40, %p41
      %s44 = sadd.s32 %s43, 1
      %p47 = scmp.eq.s32.totalorder %s9, 1
      %p48 = scmp.ne.s32.totalorder %s43, %s45
      %p49 = scmp.eq.s32.totalorder %s9, 0
      %p50 = por %p48, %p49
      %p51 = scmp.ne.s32.totalorder %s43, %s45
      %p52 = scmp.eq.s32.totalorder %s14, 1
      %p53 = por %p51, %p52
      %p54 = scmp.ne.s32.totalorder %s45, %s46
      %p55 = scmp.eq.s32.totalorder %s14, 0
      %p56 = por %p54, %p55
      %p57 = scmp.ne.s32.totalorder %s45, %s46
      %p58 = scmp.eq.s32.totalorder %s15, 1
      %p59 = por %p57, %p58
      %p61 = scmp.ne.s32.totalorder %s46, %s60
      %p62 = scmp.eq.s32.totalorder %s15, 0
      %p63 = por %p61, %p62
      %s65 = sadd.s32 %s64, 1
      %p68 = scmp.eq.s32.totalorder %s9, 1
      %p69 = scmp.ne.s32.totalorder %s64, %s66
      %p70 = scmp.eq.s32.totalorder %s9, 0
      %p71 = por %p69, %p70
      %p72 = scmp.ne.s32.totalorder %s64, %s66
      %p73 = scmp.eq.s32.totalorder %s14, 1
      %p74 = por %p72, %p73
      %p75 = scmp.ne.s32.totalorder %s66, %s67
      %p76 = scmp.eq.s32.totalorder %s14, 0
      %p77 = por %p75, %p76
      %p78 = scmp.ne.s32.totalorder %s66, %s67
      %p79 = scmp.eq.s32.totalorder %s15, 1
      %p80 = por %p78, %p79
      %p82 = scmp.ne.s32.totalorder %s67, %s81
      %p83 = scmp.eq.s32.totalorder %s15, 0
      %p84 = por %p82, %p83
      %s85 = ssub.s32 %s9, %s16
      %p86 = scmp.eq.s32.totalorder %s85, 0
      %s88 = sadd.s32 %s87, 1
      %s89 = scalar_select %p86, %s87, %s88
      %p92 = pneg %p86
      %p93 = scmp.eq.s32.totalorder %s9, 1
      %p94 = por %p92, %p93
      %p95 = scmp.ne.s32.totalorder %s87, %s90
      %p96 = scmp.eq.s32.totalorder %s9, 0
      %p97 = por %p95, %p96
      %p98 = scmp.ne.s32.totalorder %s87, %s90
      %p99 = scmp.eq.s32.totalorder %s14, 1
      %p100 = por %p98, %p99
      %p101 = scmp.ne.s32.totalorder %s90, %s91
      %p102 = scmp.eq.s32.totalorder %s14, 0
      %p103 = por %p101, %p102
      %p104 = scmp.ne.s32.totalorder %s90, %s91
      %p105 = scmp.eq.s32.totalorder %s15, 1
      %p106 = por %p104, %p105
      %p108 = scmp.ne.s32.totalorder %s91, %s107
      %p109 = scmp.eq.s32.totalorder %s15, 0
      %p110 = por %p108, %p109
      %p111 = scmp.le.s32.totalorder 1, %s9
      %p112 = scmp.lt.s32.totalorder %s9, 3
      %p113 = pnand %p111, %p112
      %p114 = pneg %p113
      // Predicated region
      $region9: #{net_forward.5} parent=5 // pred_check
        _
      $region10: #{net_forward.5} parent=5 // pred_check_branch
        %116 = sbr.rel (%p113) target = $region12
      $region11: #{net_forward.5} parent=5 // pred_region
        %s117 = ssub.s32 %s9, 1
        // Predicated region
        $region13: #{net_forward.5} parent=11 // pred_check
          %p118 = pneg %p56
        $region14: #{net_forward.5} parent=11 // pred_check_branch
          %120 = sbr.rel (%p118) target = $region16
        $region15: #{net_forward.5} parent=11 // pred_region
          _
        $region16: #{net_forward.5} parent=11 // pred_fallthru
          _
        // Predicated region
        $region17: #{net_forward.5} parent=11 // pred_check
          %p121 = pneg %p77
        $region18: #{net_forward.5} parent=11 // pred_check_branch
          %123 = sbr.rel (%p121) target = $region20
        $region19: #{net_forward.5} parent=11 // pred_region
          _
        $region20: #{net_forward.5} parent=11 // pred_fallthru
          _
      $region12: #{net_forward.5} parent=5 // pred_fallthru
        _
      %p124 = scmp.lt.s32.totalorder %s9, 2
      // Predicated region
      $region21: #{net_forward.5} parent=5 // pred_check
        %p125 = pneg %p124
      $region22: #{net_forward.5} parent=5 // pred_check_branch
        %127 = sbr.rel (%p125) target = $region24
      $region23: #{net_forward.5} parent=5 // pred_region
        // Predicated region
        $region25: #{net_forward.5} parent=23 // pred_check
          %p128 = pneg %p29
        $region26: #{net_forward.5} parent=23 // pred_check_branch
          %130 = sbr.rel (%p128) target = $region28
        $region27: #{net_forward.5} parent=23 // pred_region
          %s131 = sand.u32 %s19, 1
          %s132 = sand.u32 %s19, 1
          %s133 = smul.addr %s132, 144
          %s134 = scalar_lea.vmem [#allocation2], %s133
          %s135 = smul.u32 2, %s9
          %s136 = smul.addr %s135, 8
          %s137 = scalar_lea.vmem %s0, %s136
          // Predicated region
          $region29: #{net_forward.5} parent=27 // pred_check
            _
          $region30: #{net_forward.5} parent=27 // pred_check_branch
            %139 = sbr.rel (0) target = $region32
          $region31: #{net_forward.5} parent=27 // pred_region
            // Predicated region
            $region33: #{net_forward.5} parent=31 // pred_check
              _
            $region34: #{net_forward.5} parent=31 // pred_check_branch
              %141 = sbr.rel (0) target = $region36
            $region35: #{net_forward.5} parent=31 // pred_region
              loop: start=0, step=1, limit=1
              $region37: #{net_forward.5} parent=35 // loop_pre_header
                _
              $region38: #{net_forward.5} parent=35 // loop_header
                %s143 = sphi 0, %s147
                %p144 = scmp.ge.s32.totalorder %s143, 1
                %s148 = sphi %s137, %s137
                %s149 = sphi %s134, %s134
              $region39: #{net_forward.5} parent=35 // loop_header_branch
                %146 = sbr.rel (%p144) target = $region43
              $region40: #{net_forward.5} parent=35 // loop_body
                %v150 = vld [vmem:[%s148] sm:$0xff]
                %151 = vst [vmem:[%s149] sm:$0xff] %v150
                %v152 = vld [vmem:[%s148 + $0x8] sm:$0xff]
                %153 = vst [vmem:[%s149 + $0x8] sm:$0xff] %v152
                %v154 = vld [vmem:[%s148 + $0x20] sm:$0xff]
                %155 = vst [vmem:[%s149 + $0x10] sm:$0xff] %v154
                %v156 = vld [vmem:[%s148 + $0x28] sm:$0xff]
                %157 = vst [vmem:[%s149 + $0x18] sm:$0xff] %v156
                %v158 = vld [vmem:[%s148 + $0x40] sm:$0xff]
                %159 = vst [vmem:[%s149 + $0x20] sm:$0xff] %v158
                %v160 = vld [vmem:[%s148 + $0x48] sm:$0xff]
                %161 = vst [vmem:[%s149 + $0x28] sm:$0xff] %v160
                %v162 = vld [vmem:[%s148 + $0x60] sm:$0xff]
                %163 = vst [vmem:[%s149 + $0x30] sm:$0xff] %v162
                %v164 = vld [vmem:[%s148 + $0x68] sm:$0xff]
                %165 = vst [vmem:[%s149 + $0x38] sm:$0xff] %v164
                %v166 = vld [vmem:[%s148 + $0x80] sm:$0xff]
                %167 = vst [vmem:[%s149 + $0x40] sm:$0xff] %v166
                %v168 = vld [vmem:[%s148 + $0x88] sm:$0xff]
                %169 = vst [vmem:[%s149 + $0x48] sm:$0xff] %v168
                %v170 = vld [vmem:[%s148 + $0xa0] sm:$0xff]
                %171 = vst [vmem:[%s149 + $0x50] sm:$0xff] %v170
                %v172 = vld [vmem:[%s148 + $0xa8] sm:$0xff]
                %173 = vst [vmem:[%s149 + $0x58] sm:$0xff] %v172
                %v174 = vld [vmem:[%s148 + $0xc0] sm:$0xff]
                %175 = vst [vmem:[%s149 + $0x60] sm:$0xff] %v174
                %v176 = vld [vmem:[%s148 + $0xc8] sm:$0xff]
                %177 = vst [vmem:[%s149 + $0x68] sm:$0xff] %v176
                %v178 = vld [vmem:[%s148 + $0xe0] sm:$0xff]
                %179 = vst [vmem:[%s149 + $0x70] sm:$0xff] %v178
                %v180 = vld [vmem:[%s148 + $0xe8] sm:$0xff]
                %181 = vst [vmem:[%s149 + $0x78] sm:$0xff] %v180
                %v182 = vld [vmem:[%s148 + $0x100] sm:$0xff]
                %183 = vst [vmem:[%s149 + $0x80] sm:$0xff] %v182
                %v184 = vld [vmem:[%s148 + $0x108] sm:$0xff]
                %185 = vst [vmem:[%s149 + $0x88] sm:$0xff] %v184
              $region41: #{net_forward.5} parent=35 // loop_footer
                %s147 = sadd.s32 1, %s143
              $region42: #{net_forward.5} parent=35 // loop_footer_branch
                %142 = sbr.rel target = $region38
              $region43: #{net_forward.5} parent=35 // loop_exit
                _
            $region36: #{net_forward.5} parent=31 // pred_fallthru
              _
            // Predicated region
            $region44: #{net_forward.5} parent=31 // pred_check
              _
            $region45: #{net_forward.5} parent=31 // pred_check_branch
              %187 = sbr.rel target = $region47
            $region46: #{net_forward.5} parent=31 // pred_region
              _
            $region47: #{net_forward.5} parent=31 // pred_fallthru
              _
          $region32: #{net_forward.5} parent=27 // pred_fallthru
            _
          %188 = vnop
        $region28: #{net_forward.5} parent=23 // pred_fallthru
          _
      $region24: #{net_forward.5} parent=5 // pred_fallthru
        _
      %p189 = scmp.le.s32.totalorder 1, %s9
      %p190 = scmp.lt.s32.totalorder %s9, 3
      %p191 = pnand %p189, %p190
      %p192 = pneg %p191
      // Predicated region
      $region48: #{net_forward.5} parent=5 // pred_check
        _
      $region49: #{net_forward.5} parent=5 // pred_check_branch
        %194 = sbr.rel (%p191) target = $region51
      $region50: #{net_forward.5} parent=5 // pred_region
        %s195 = ssub.s32 %s9, 1
        %s196 = sand.u32 %s22, 1
        %s197 = sand.u32 %s22, 1
        %s198 = smul.addr %s197, 144
        %s199 = scalar_lea.vmem [#allocation2], %s198
        // Predicated region
        $region52: #{net_forward.5} parent=50 // pred_check
          %p200 = pneg %p35
        $region53: #{net_forward.5} parent=50 // pred_check_branch
          %202 = sbr.rel (%p200) target = $region55
        $region54: #{net_forward.5} parent=50 // pred_region
          _
        $region55: #{net_forward.5} parent=50 // pred_fallthru
          _
        %s203 = sand.u32 %s22, 1
        %s204 = sand.u32 %s22, 1
        %s205 = smul.addr %s204, 144
        %s206 = scalar_lea.vmem [#allocation2], %s205
        %p207 = pneg %p35
        %p208 = pneg %p32
        %p209 = pneg %p56
        %p210 = pneg %p53
        %p211 = pneg %p77
        %p212 = pneg %p74
        %p213 = pneg %p103
        %p214 = pneg %p100
        %s215 = sand.u32 %s90, 1
        %s216 = sand.u32 %s90, 1
        %s217 = smul.addr %s216, 32
        %s218 = scalar_lea.vmem [#allocation3], %s217
        %s219 = smul.u32 2, %s14
        %s220 = smul.u32 2, %s14
        %v221 = vld [vmem:[%s1] sm:$0xff]
        %v222 = vld [vmem:[%s1 + $0x8] sm:$0xff]
        %v223 = vld [vmem:[%s199] sm:$0xff]
        %v224 = vld [vmem:[%s199 + $0x8] sm:$0xff]
        %v225 = vld [vmem:[%s199 + $0x10] sm:$0xff]
        %v226 = vld [vmem:[%s199 + $0x18] sm:$0xff]
        %v227 = vld [vmem:[%s199 + $0x20] sm:$0xff]
        %v228 = vld [vmem:[%s199 + $0x28] sm:$0xff]
        %v229 = vld [vmem:[%s199 + $0x30] sm:$0xff]
        %v230 = vld [vmem:[%s199 + $0x38] sm:$0xff]
        %v231 = vld [vmem:[%s199 + $0x40] sm:$0xff]
        %v232 = vld [vmem:[%s199 + $0x48] sm:$0xff]
        %v233 = vld [vmem:[%s199 + $0x50] sm:$0xff]
        %v234 = vld [vmem:[%s199 + $0x58] sm:$0xff]
        %v235 = vld [vmem:[%s199 + $0x60] sm:$0xff]
        %v236 = vld [vmem:[%s199 + $0x68] sm:$0xff]
        %v237 = vld [vmem:[%s199 + $0x70] sm:$0xff]
        %v238 = vld [vmem:[%s199 + $0x78] sm:$0xff]
        %v239 = vld [vmem:[%s199 + $0x80] sm:$0xff]
        %v240 = vld [vmem:[%s199 + $0x88] sm:$0xff]
        %v241 = vld [vmem:[%s2] sm:$0xff]
        %v242 = vld [vmem:[%s2 + $0x8] sm:$0xff]
        %244 = vset.pattern.permute.xlu0 0
        %245 = vperm.xlu0 %244, %v241
        %v246 = vpop.permute.xlu0 %245
        %249 = vset.pattern.permute.xlu0 0
        %250 = vperm.xlu0 %249, %v242
        %v251 = vpop.permute.xlu0 %250
        %vm253 = vcmask 588800
        %v255 = vsel %vm253, %v221, 0
        %v258 = vsel %vm253, %v222, 0
        %260 = vmatpush.msra.mxu0 0.0
        %261 = vmatpush.msra.mxu0 0.0
        %262 = vmatpush.msra.mxu0 0.0
        %263 = vmatpush.msra.mxu0 0.0
        %264 = vmatpush.msra.mxu0 0.0
        %265 = vmatpush.msra.mxu0 0.0
        %266 = vmatpush.msra.mxu0 0.0
        %267 = vmatpush.msra.mxu0 %v239
        %268 = vmatpush.msra.mxu0 %v237
        %269 = vmatpush.msra.mxu0 %v235
        %270 = vmatpush.msra.mxu0 %v233
        %271 = vmatpush.msra.mxu0 %v231
        %272 = vmatpush.msra.mxu0 %v229
        %273 = vmatpush.msra.mxu0 %v227
        %274 = vmatpush.msra.mxu0 %v225
        %275 = vmatpush.msra.mxu0 %v223
        %276 = vmatmul.f32.gmra.mxu0 %v255
        %v277 = vpop.f32.mrf.mxu0
        %v278 = vadd.f32 %v246, %v277
        %279 = vmatmul.f32.gmra.mxu0 %v258
        %v280 = vpop.f32.mrf.mxu0
        %v281 = vadd.f32 %v251, %v280
        %282 = vdwg.mxu0
        %283 = vmatpush.msra.mxu0 0.0
        %284 = vmatpush.msra.mxu0 0.0
        %285 = vmatpush.msra.mxu0 0.0
        %286 = vmatpush.msra.mxu0 0.0
        %287 = vmatpush.msra.mxu0 0.0
        %288 = vmatpush.msra.mxu0 0.0
        %289 = vmatpush.msra.mxu0 0.0
        %290 = vmatpush.msra.mxu0 %v240
        %291 = vmatpush.msra.mxu0 %v238
        %292 = vmatpush.msra.mxu0 %v236
        %293 = vmatpush.msra.mxu0 %v234
        %294 = vmatpush.msra.mxu0 %v232
        %295 = vmatpush.msra.mxu0 %v230
        %296 = vmatpush.msra.mxu0 %v228
        %297 = vmatpush.msra.mxu0 %v226
        %298 = vmatpush.msra.mxu0 %v224
        %299 = vmatmul.f32.gmra.mxu0 %v255
        %v300 = vpop.f32.mrf.mxu0
        %v301 = vadd.f32 %v246, %v300
        %302 = vmatmul.f32.gmra.mxu0 %v258
        %v303 = vpop.f32.mrf.mxu0
        %v304 = vadd.f32 %v251, %v303
        %305 = vdwg.mxu0
        %v306 = vmax.f32 %v278, 0.0
        %v307 = vmax.f32 %v301, 0.0
        %v308 = vmax.f32 %v281, 0.0
        %v309 = vmax.f32 %v304, 0.0
        %310 = vst [vmem:[%s218] sm:$0xff] %v306
        %311 = vst [vmem:[%s218 + $0x8] sm:$0xff] %v307
        %312 = vst [vmem:[%s218 + $0x10] sm:$0xff] %v308
        %313 = vst [vmem:[%s218 + $0x18] sm:$0xff] %v309
        %s314 = sand.u32 %s90, 1
        %s315 = sand.u32 %s90, 1
        %s316 = smul.addr %s315, 32
        %s317 = scalar_lea.vmem [#allocation3], %s316
        // Predicated region
        $region56: #{net_forward.5} parent=50 // pred_check
          %p318 = pneg %p100
        $region57: #{net_forward.5} parent=50 // pred_check_branch
          %320 = sbr.rel (%p318) target = $region59
        $region58: #{net_forward.5} parent=50 // pred_region
          %s321 = smul.u32 2, %s14
          %s322 = smul.addr %s321, 8
          %s323 = scalar_lea.vmem %s3, %s322
          // Predicated region
          $region60: #{net_forward.5} parent=58 // pred_check
            _
          $region61: #{net_forward.5} parent=58 // pred_check_branch
            %325 = sbr.rel (0) target = $region63
          $region62: #{net_forward.5} parent=58 // pred_region
            // Predicated region
            $region64: #{net_forward.5} parent=62 // pred_check
              _
            $region65: #{net_forward.5} parent=62 // pred_check_branch
              %327 = sbr.rel (0) target = $region67
            $region66: #{net_forward.5} parent=62 // pred_region
              loop: start=0, step=1, limit=1
              $region68: #{net_forward.5} parent=66 // loop_pre_header
                _
              $region69: #{net_forward.5} parent=66 // loop_header
                %s329 = sphi 0, %s333
                %p330 = scmp.ge.s32.totalorder %s329, 1
                %s334 = sphi %s317, %s317
                %s335 = sphi %s323, %s323
              $region70: #{net_forward.5} parent=66 // loop_header_branch
                %332 = sbr.rel (%p330) target = $region74
              $region71: #{net_forward.5} parent=66 // loop_body
                %v336 = vld [vmem:[%s334] sm:$0xff]
                %337 = vst [vmem:[%s335] sm:$0xff] %v336
                %v338 = vld [vmem:[%s334 + $0x8] sm:$0xff]
                %339 = vst [vmem:[%s335 + $0x8] sm:$0xff] %v338
                %v340 = vld [vmem:[%s334 + $0x10] sm:$0xff]
                %341 = vst [vmem:[%s335 + $0x20] sm:$0xff] %v340
                %v342 = vld [vmem:[%s334 + $0x18] sm:$0xff]
                %343 = vst [vmem:[%s335 + $0x28] sm:$0xff] %v342
              $region72: #{net_forward.5} parent=66 // loop_footer
                %s333 = sadd.s32 1, %s329
              $region73: #{net_forward.5} parent=66 // loop_footer_branch
                %328 = sbr.rel target = $region69
              $region74: #{net_forward.5} parent=66 // loop_exit
                _
            $region67: #{net_forward.5} parent=62 // pred_fallthru
              _
            // Predicated region
            $region75: #{net_forward.5} parent=62 // pred_check
              _
            $region76: #{net_forward.5} parent=62 // pred_check_branch
              %345 = sbr.rel target = $region78
            $region77: #{net_forward.5} parent=62 // pred_region
              _
            $region78: #{net_forward.5} parent=62 // pred_fallthru
              _
          $region63: #{net_forward.5} parent=58 // pred_fallthru
            _
          %346 = vnop
        $region59: #{net_forward.5} parent=50 // pred_fallthru
          _
      $region51: #{net_forward.5} parent=5 // pred_fallthru
        _
      %p347 = scmp.le.s32.totalorder 2, %s9
      // Predicated region
      $region79: #{net_forward.5} parent=5 // pred_check
        %p348 = pneg %p347
      $region80: #{net_forward.5} parent=5 // pred_check_branch
        %350 = sbr.rel (%p348) target = $region82
      $region81: #{net_forward.5} parent=5 // pred_region
        %s351 = ssub.s32 %s9, 2
        // Predicated region
        $region83: #{net_forward.5} parent=81 // pred_check
          %p352 = pneg %p106
        $region84: #{net_forward.5} parent=81 // pred_check_branch
          %354 = sbr.rel (%p352) target = $region86
        $region85: #{net_forward.5} parent=81 // pred_region
          %s355 = sand.u32 %s91, 1
          %s356 = sand.u32 %s91, 1
          %s357 = smul.addr %s356, 32
          %s358 = scalar_lea.vmem [#allocation3], %s357
        $region86: #{net_forward.5} parent=81 // pred_fallthru
          _
      $region82: #{net_forward.5} parent=5 // pred_fallthru
        _
    $region6: #{net_forward.5} parent=1 // loop_footer
      %s13 = sadd.s32 1, %s9
    $region7: #{net_forward.5} parent=1 // loop_footer_branch
      %8 = sbr.rel target = $region3
    $region8: #{net_forward.5} parent=1 // loop_exit
      _

// kernel: net_forward.6
$region0: #{net_forward.6}
  #allocation0 [shape = 'u32[]', space=smem, size = 0x4, offset = 0x4, fixed_abs, tag = 'smem constant byte address 0x4 - core index']
  #allocation1 [shape = 'u32[72,128]{1,0:T(1,128)}', space=vmem, size = 0x9000, scoped, tag = 'internal scratch']
  %s0 = inlined_call_operand.vmem [shape: f32[144,128], index: 0, kind: input, shape index: {}]
  %s1 = inlined_call_operand.vmem [shape: f32[16,144], index: 1, kind: input, shape index: {}]
  %s2 = inlined_call_operand.vmem [shape: f32[16,1], index: 2, kind: input, shape index: {}]
  %s3 = inlined_call_operand.vmem [shape: f32[16,128], index: 3, kind: output, shape index: {}]
  %s4 = sld [smem:[#allocation0]]
  $region22: #{net_forward.6} parent=0
    _
  %s6 = ssub.s32 1, %s4
  %s7 = scalar_select 0, %s6, %s4
  // Predicated region
  $region2: #{net_forward.6} parent=0 // pred_check
    _
  $region3: #{net_forward.6} parent=0 // pred_check_branch
    %9 = sbr.rel (0) target = $region5
  $region4: #{net_forward.6} parent=0 // pred_region
    _
  $region5: #{net_forward.6} parent=0 // pred_fallthru
    _
  // Predicated region
  $region6: #{net_forward.6} parent=0 // pred_check
    _
  $region7: #{net_forward.6} parent=0 // pred_check_branch
    %11 = sbr.rel (0) target = $region9
  $region8: #{net_forward.6} parent=0 // pred_region
    _
  $region9: #{net_forward.6} parent=0 // pred_fallthru
    _
  // Predicated region
  $region10: #{net_forward.6} parent=0 // pred_check
    _
  $region11: #{net_forward.6} parent=0 // pred_check_branch
    %13 = sbr.rel (0) target = $region13
  $region12: #{net_forward.6} parent=0 // pred_region
    _
  $region13: #{net_forward.6} parent=0 // pred_fallthru
    _
  %v14 = vld [vmem:[%s1] sm:$0xff]
  %v15 = vld [vmem:[%s1 + $0x8] sm:$0xff]
  %v16 = vld [vmem:[%s1 + $0x10] sm:$0xff]
  %v17 = vld [vmem:[%s1 + $0x18] sm:$0xff]
  %v18 = vld [vmem:[%s0] sm:$0xff]
  %v19 = vld [vmem:[%s0 + $0x8] sm:$0xff]
  %v20 = vld [vmem:[%s0 + $0x10] sm:$0xff]
  %v21 = vld [vmem:[%s0 + $0x18] sm:$0xff]
  %v22 = vld [vmem:[%s0 + $0x20] sm:$0xff]
  %v23 = vld [vmem:[%s0 + $0x28] sm:$0xff]
  %v24 = vld [vmem:[%s0 + $0x30] sm:$0xff]
  %v25 = vld [vmem:[%s0 + $0x38] sm:$0xff]
  %v26 = vld [vmem:[%s0 + $0x40] sm:$0xff]
  %v27 = vld [vmem:[%s0 + $0x48] sm:$0xff]
  %v28 = vld [vmem:[%s0 + $0x50] sm:$0xff]
  %v29 = vld [vmem:[%s0 + $0x58] sm:$0xff]
  %v30 = vld [vmem:[%s0 + $0x60] sm:$0xff]
  %v31 = vld [vmem:[%s0 + $0x68] sm:$0xff]
  %v32 = vld [vmem:[%s0 + $0x70] sm:$0xff]
  %v33 = vld [vmem:[%s0 + $0x78] sm:$0xff]
  %v34 = vld [vmem:[%s0 + $0x80] sm:$0xff]
  %v35 = vld [vmem:[%s0 + $0x88] sm:$0xff]
  %v36 = vld [vmem:[%s2] sm:$0xff]
  %v37 = vld [vmem:[%s2 + $0x8] sm:$0xff]
  %39 = vset.pattern.permute.xlu0 0
  %40 = vperm.xlu0 %39, %v36
  %v41 = vpop.permute.xlu0 %40
  %44 = vset.pattern.permute.xlu0 0
  %45 = vperm.xlu0 %44, %v37
  %v46 = vpop.permute.xlu0 %45
  %vm48 = vcmask 130048
  %v50 = vsel %vm48, %v15, 0
  %v53 = vsel %vm48, %v17, 0
  %55 = vmatpush.msra.mxu0 %v33
  %56 = vmatpush.msra.mxu0 %v32
  %57 = vmatpush.msra.mxu0 %v31
  %58 = vmatpush.msra.mxu0 %v30
  %59 = vmatpush.msra.mxu0 %v29
  %60 = vmatpush.msra.mxu0 %v28
  %61 = vmatpush.msra.mxu0 %v27
  %62 = vmatpush.msra.mxu0 %v26
  %63 = vmatpush.msra.mxu0 %v25
  %64 = vmatpush.msra.mxu0 %v24
  %65 = vmatpush.msra.mxu0 %v23
  %66 = vmatpush.msra.mxu0 %v22
  %67 = vmatpush.msra.mxu0 %v21
  %68 = vmatpush.msra.mxu0 %v20
  %69 = vmatpush.msra.mxu0 %v19
  %70 = vmatpush.msra.mxu0 %v18
  %71 = vmatmul.f32.gmra.mxu0 %v14
  %v72 = vpop.f32.mrf.mxu0
  %v73 = vadd.f32 %v41, %v72
  %74 = vmatmul.f32.gmra.mxu0 %v16
  %v75 = vpop.f32.mrf.mxu0
  %v76 = vadd.f32 %v46, %v75
  %77 = vdwg.mxu0
  %78 = vmatpush.msra.mxu0 0.0
  %79 = vmatpush.msra.mxu0 0.0
  %80 = vmatpush.msra.mxu0 0.0
  %81 = vmatpush.msra.mxu0 0.0
  %82 = vmatpush.msra.mxu0 0.0
  %83 = vmatpush.msra.mxu0 0.0
  %84 = vmatpush.msra.mxu0 0.0
  %85 = vmatpush.msra.mxu0 0.0
  %86 = vmatpush.msra.mxu0 0.0
  %87 = vmatpush.msra.mxu0 0.0
  %88 = vmatpush.msra.mxu0 0.0
  %89 = vmatpush.msra.mxu0 0.0
  %90 = vmatpush.msra.mxu0 0.0
  %91 = vmatpush.msra.mxu0 0.0
  %92 = vmatpush.msra.mxu0 %v35
  %93 = vmatpush.msra.mxu0 %v34
  %94 = vmatmul.f32.gmra.mxu0 %v50
  %v95 = vpop.f32.mrf.mxu0
  %v96 = vadd.f32 %v73, %v95
  %97 = vmatmul.f32.gmra.mxu0 %v53
  %v98 = vpop.f32.mrf.mxu0
  %v99 = vadd.f32 %v76, %v98
  %100 = vdwg.mxu0
  %v101 = vmax.f32 %v96, 0.0
  %v102 = vmax.f32 %v99, 0.0
  %103 = vst [vmem:[%s3] sm:$0xff] %v101
  %104 = vst [vmem:[%s3 + $0x8] sm:$0xff] %v102
  // Predicated region
  $region14: #{net_forward.6} parent=0 // pred_check
    _
  $region15: #{net_forward.6} parent=0 // pred_check_branch
    %106 = sbr.rel (0) target = $region17
  $region16: #{net_forward.6} parent=0 // pred_region
    _
  $region17: #{net_forward.6} parent=0 // pred_fallthru
    _
  // Predicated region
  $region18: #{net_forward.6} parent=0 // pred_check
    _
  $region19: #{net_forward.6} parent=0 // pred_check_branch
    %108 = sbr.rel (0) target = $region21
  $region20: #{net_forward.6} parent=0 // pred_region
    _
  $region21: #{net_forward.6} parent=0 // pred_fallthru
    _

// kernel: net_forward.7
$region0: #{net_forward.7}
  #allocation0 [shape = 'u32[]', space=smem, size = 0x4, offset = 0x4, fixed_abs, tag = 'smem constant byte address 0x4 - core index']
  #allocation1 [shape = 'u32[72,128]{1,0:T(1,128)}', space=vmem, size = 0x9000, scoped, tag = 'internal scratch']
  %s0 = inlined_call_operand.vmem [shape: f32[32,144], index: 0, kind: input, shape index: {}]
  %s1 = inlined_call_operand.vmem [shape: f32[144,16], index: 1, kind: input, shape index: {}]
  %s2 = inlined_call_operand.vmem [shape: f32[1,16], index: 2, kind: input, shape index: {}]
  %s3 = inlined_call_operand.vmem [shape: f32[256,32], index: 3, kind: input, shape index: {}]
  %s4 = inlined_call_operand.vmem [shape: f32[1,32], index: 4, kind: input, shape index: {}]
  %s5 = inlined_call_operand.vmem [shape: f32[32,10], index: 5, kind: input, shape index: {}]
  %s6 = inlined_call_operand.vmem [shape: f32[1,10], index: 6, kind: input, shape index: {}]
  %s7 = inlined_call_operand.hbm [shape: f32[2,10], index: 7, kind: output, shape index: {}]
  %s8 = sld [smem:[#allocation0]]
  $region38: #{net_forward.7} parent=0
    _
  %s10 = ssub.s32 1, %s8
  %s11 = scalar_select 0, %s10, %s8
  $region1: #{net_forward.7} parent=0
    #allocation2 [shape = 'u8[1024]{0}', space=vmem, size = 0x400, scoped, tag = 'output window, operand 0, single buffered']
    #allocation3 [shape = 's32[1]{0}', space=sflag, size = 0x4, scoped, tag = 'scoped memory for net_forward.7']
    %12 = vsyncpa [#allocation3], 0
    // Predicated region
    $region2: #{net_forward.7} parent=1 // pred_check
      _
    $region3: #{net_forward.7} parent=1 // pred_check_branch
      %14 = sbr.rel (0) target = $region5
    $region4: #{net_forward.7} parent=1 // pred_region
      _
    $region5: #{net_forward.7} parent=1 // pred_fallthru
      _
    // Predicated region
    $region6: #{net_forward.7} parent=1 // pred_check
      _
    $region7: #{net_forward.7} parent=1 // pred_check_branch
      %16 = sbr.rel (0) target = $region9
    $region8: #{net_forward.7} parent=1 // pred_region
      _
    $region9: #{net_forward.7} parent=1 // pred_fallthru
      _
    // Predicated region
    $region10: #{net_forward.7} parent=1 // pred_check
      _
    $region11: #{net_forward.7} parent=1 // pred_check_branch
      %18 = sbr.rel (0) target = $region13
    $region12: #{net_forward.7} parent=1 // pred_region
      _
    $region13: #{net_forward.7} parent=1 // pred_fallthru
      _
    // Predicated region
    $region14: #{net_forward.7} parent=1 // pred_check
      _
    $region15: #{net_forward.7} parent=1 // pred_check_branch
      %20 = sbr.rel (0) target = $region17
    $region16: #{net_forward.7} parent=1 // pred_region
      _
    $region17: #{net_forward.7} parent=1 // pred_fallthru
      _
    // Predicated region
    $region18: #{net_forward.7} parent=1 // pred_check
      _
    $region19: #{net_forward.7} parent=1 // pred_check_branch
      %22 = sbr.rel (0) target = $region21
    $region20: #{net_forward.7} parent=1 // pred_region
      _
    $region21: #{net_forward.7} parent=1 // pred_fallthru
      _
    // Predicated region
    $region22: #{net_forward.7} parent=1 // pred_check
      _
    $region23: #{net_forward.7} parent=1 // pred_check_branch
      %24 = sbr.rel (0) target = $region25
    $region24: #{net_forward.7} parent=1 // pred_region
      _
    $region25: #{net_forward.7} parent=1 // pred_fallthru
      _
    // Predicated region
    $region26: #{net_forward.7} parent=1 // pred_check
      _
    $region27: #{net_forward.7} parent=1 // pred_check_branch
      %26 = sbr.rel (0) target = $region29
    $region28: #{net_forward.7} parent=1 // pred_region
      _
    $region29: #{net_forward.7} parent=1 // pred_fallthru
      _
    %v27 = vld [vmem:[%s0] sm:$0xff]
    %v28 = vld [vmem:[%s0 + $0x8] sm:$0xff]
    %v29 = vld [vmem:[%s0 + $0x10] sm:$0xff]
    %v30 = vld [vmem:[%s0 + $0x18] sm:$0xff]
    %v31 = vld [vmem:[%s0 + $0x20] sm:$0xff]
    %v32 = vld [vmem:[%s0 + $0x28] sm:$0xff]
    %v33 = vld [vmem:[%s0 + $0x30] sm:$0xff]
    %v34 = vld [vmem:[%s0 + $0x38] sm:$0xff]
    %v35 = vld [vmem:[%s1] sm:$0xff]
    %v36 = vld [vmem:[%s1 + $0x8] sm:$0xff]
    %v37 = vld [vmem:[%s1 + $0x10] sm:$0xff]
    %v38 = vld [vmem:[%s1 + $0x18] sm:$0xff]
    %v39 = vld [vmem:[%s1 + $0x20] sm:$0xff]
    %v40 = vld [vmem:[%s1 + $0x28] sm:$0xff]
    %v41 = vld [vmem:[%s1 + $0x30] sm:$0xff]
    %v42 = vld [vmem:[%s1 + $0x38] sm:$0xff]
    %v43 = vld [vmem:[%s1 + $0x40] sm:$0xff]
    %v44 = vld [vmem:[%s1 + $0x48] sm:$0xff]
    %v45 = vld [vmem:[%s1 + $0x50] sm:$0xff]
    %v46 = vld [vmem:[%s1 + $0x58] sm:$0xff]
    %v47 = vld [vmem:[%s1 + $0x60] sm:$0xff]
    %v48 = vld [vmem:[%s1 + $0x68] sm:$0xff]
    %v49 = vld [vmem:[%s1 + $0x70] sm:$0xff]
    %v50 = vld [vmem:[%s1 + $0x78] sm:$0xff]
    %v51 = vld [vmem:[%s1 + $0x80] sm:$0xff]
    %v52 = vld [vmem:[%s1 + $0x88] sm:$0xff]
    %v53 = vld [vmem:[%s2] sm:$0x1]
    %v55 = vperm.slane %v53, 0
    %vm57 = vcmask 130048
    %v59 = vsel %vm57, %v28, 0
    %v62 = vsel %vm57, %v30, 0
    %v65 = vsel %vm57, %v32, 0
    %v68 = vsel %vm57, %v34, 0
    %70 = vmatpush.msra.mxu0 %v50
    %71 = vmatpush.msra.mxu0 %v49
    %72 = vmatpush.msra.mxu0 %v48
    %73 = vmatpush.msra.mxu0 %v47
    %74 = vmatpush.msra.mxu0 %v46
    %75 = vmatpush.msra.mxu0 %v45
    %76 = vmatpush.msra.mxu0 %v44
    %77 = vmatpush.msra.mxu0 %v43
    %78 = vmatpush.msra.mxu0 %v42
    %79 = vmatpush.msra.mxu0 %v41
    %80 = vmatpush.msra.mxu0 %v40
    %81 = vmatpush.msra.mxu0 %v39
    %82 = vmatpush.msra.mxu0 %v38
    %83 = vmatpush.msra.mxu0 %v37
    %84 = vmatpush.msra.mxu0 %v36
    %85 = vmatpush.msra.mxu0 %v35
    %86 = vmatmul.f32.gmra.mxu0 %v27
    %v87 = vpop.f32.mrf.mxu0
    %v88 = vadd.f32 %v55, %v87
    %89 = vmatmul.f32.gmra.mxu0 %v29
    %v90 = vpop.f32.mrf.mxu0
    %v91 = vadd.f32 %v55, %v90
    %92 = vmatmul.f32.gmra.mxu0 %v31
    %v93 = vpop.f32.mrf.mxu0
    %v94 = vadd.f32 %v55, %v93
    %95 = vmatmul.f32.gmra.mxu0 %v33
    %v96 = vpop.f32.mrf.mxu0
    %v97 = vadd.f32 %v55, %v96
    %98 = vdwg.mxu0
    %99 = vmatpush.msra.mxu0 0.0
    %100 = vmatpush.msra.mxu0 0.0
    %101 = vmatpush.msra.mxu0 0.0
    %102 = vmatpush.msra.mxu0 0.0
    %103 = vmatpush.msra.mxu0 0.0
    %104 = vmatpush.msra.mxu0 0.0
    %105 = vmatpush.msra.mxu0 0.0
    %106 = vmatpush.msra.mxu0 0.0
    %107 = vmatpush.msra.mxu0 0.0
    %108 = vmatpush.msra.mxu0 0.0
    %109 = vmatpush.msra.mxu0 0.0
    %110 = vmatpush.msra.mxu0 0.0
    %111 = vmatpush.msra.mxu0 0.0
    %112 = vmatpush.msra.mxu0 0.0
    %113 = vmatpush.msra.mxu0 %v52
    %114 = vmatpush.msra.mxu0 %v51
    %115 = vmatmul.f32.gmra.mxu0 %v59
    %v116 = vpop.f32.mrf.mxu0
    %v117 = vadd.f32 %v88, %v116
    %118 = vmatmul.f32.gmra.mxu0 %v62
    %v119 = vpop.f32.mrf.mxu0
    %v120 = vadd.f32 %v91, %v119
    %121 = vmatmul.f32.gmra.mxu0 %v65
    %v122 = vpop.f32.mrf.mxu0
    %v123 = vadd.f32 %v94, %v122
    %124 = vmatmul.f32.gmra.mxu0 %v68
    %v125 = vpop.f32.mrf.mxu0
    %v126 = vadd.f32 %v97, %v125
    %127 = vdwg.mxu0
    %v128 = vmax.f32 %v117, 0.0
    %v129 = vmax.f32 %v120, 0.0
    %v130 = vmax.f32 %v123, 0.0
    %v131 = vmax.f32 %v126, 0.0
    %v133 = vrot.slane %v128, 1
    %134 = vrot.lane.b32.xlu0 %v133, 16
    %v135 = vpop.permute.xlu0 %134
    %v137 = vrot.slane %v128, 2
    %138 = vrot.lane.b32.xlu0 %v137, 32
    %v139 = vpop.permute.xlu0 %138
    %v141 = vrot.slane %v128, 3
    %142 = vrot.lane.b32.xlu0 %v141, 48
    %v143 = vpop.permute.xlu0 %142
    %v145 = vrot.slane %v128, 4
    %146 = vrot.lane.b32.xlu0 %v145, 64
    %v147 = vpop.permute.xlu0 %146
    %v149 = vrot.slane %v128, 5
    %150 = vrot.lane.b32.xlu0 %v149, 80
    %v151 = vpop.permute.xlu0 %150
    %v153 = vrot.slane %v128, 6
    %154 = vrot.lane.b32.xlu0 %v153, 96
    %v155 = vpop.permute.xlu0 %154
    %v157 = vrot.slane %v128, 7
    %158 = vrot.lane.b32.xlu0 %v157, 112
    %v159 = vpop.permute.xlu0 %158
    %v162 = vrot.slane %v129, 1
    %163 = vrot.lane.b32.xlu0 %v162, 16
    %v164 = vpop.permute.xlu0 %163
    %v166 = vrot.slane %v129, 2
    %167 = vrot.lane.b32.xlu0 %v166, 32
    %v168 = vpop.permute.xlu0 %167
    %v170 = vrot.slane %v129, 3
    %171 = vrot.lane.b32.xlu0 %v170, 48
    %v172 = vpop.permute.xlu0 %171
    %v174 = vrot.slane %v129, 4
    %175 = vrot.lane.b32.xlu0 %v174, 64
    %v176 = vpop.permute.xlu0 %175
    %v178 = vrot.slane %v129, 5
    %179 = vrot.lane.b32.xlu0 %v178, 80
    %v180 = vpop.permute.xlu0 %179
    %v182 = vrot.slane %v129, 6
    %183 = vrot.lane.b32.xlu0 %v182, 96
    %v184 = vpop.permute.xlu0 %183
    %v186 = vrot.slane %v129, 7
    %187 = vrot.lane.b32.xlu0 %v186, 112
    %v188 = vpop.permute.xlu0 %187
    %v190 = vsel %vm57, %v128, %v135
    %vm191 = vcmask 261120
    %v192 = vsel %vm191, %v190, %v139
    %vm193 = vcmask 392192
    %v194 = vsel %vm193, %v192, %v143
    %vm195 = vcmask 523264
    %v196 = vsel %vm195, %v194, %v147
    %vm197 = vcmask 654336
    %v198 = vsel %vm197, %v196, %v151
    %vm199 = vcmask 785408
    %v200 = vsel %vm199, %v198, %v155
    %vm201 = vcmask 916480
    %v202 = vsel %vm201, %v200, %v159
    %v203 = vsel %vm57, %v129, %v164
    %v204 = vsel %vm191, %v203, %v168
    %v205 = vsel %vm193, %v204, %v172
    %v206 = vsel %vm195, %v205, %v176
    %v207 = vsel %vm197, %v206, %v180
    %v208 = vsel %vm199, %v207, %v184
    %v209 = vsel %vm201, %v208, %v188
    %v211 = vrot.slane %v130, 1
    %212 = vrot.lane.b32.xlu0 %v211, 16
    %v213 = vpop.permute.xlu0 %212
    %v215 = vrot.slane %v130, 2
    %216 = vrot.lane.b32.xlu0 %v215, 32
    %v217 = vpop.permute.xlu0 %216
    %v219 = vrot.slane %v130, 3
    %220 = vrot.lane.b32.xlu0 %v219, 48
    %v221 = vpop.permute.xlu0 %220
    %v223 = vrot.slane %v130, 4
    %224 = vrot.lane.b32.xlu0 %v223, 64
    %v225 = vpop.permute.xlu0 %224
    %v227 = vrot.slane %v130, 5
    %228 = vrot.lane.b32.xlu0 %v227, 80
    %v229 = vpop.permute.xlu0 %228
    %v231 = vrot.slane %v130, 6
    %232 = vrot.lane.b32.xlu0 %v231, 96
    %v233 = vpop.permute.xlu0 %232
    %v235 = vrot.slane %v130, 7
    %236 = vrot.lane.b32.xlu0 %v235, 112
    %v237 = vpop.permute.xlu0 %236
    %v240 = vrot.slane %v131, 1
    %241 = vrot.lane.b32.xlu0 %v240, 16
    %v242 = vpop.permute.xlu0 %241
    %v244 = vrot.slane %v131, 2
    %245 = vrot.lane.b32.xlu0 %v244, 32
    %v246 = vpop.permute.xlu0 %245
    %v248 = vrot.slane %v131, 3
    %249 = vrot.lane.b32.xlu0 %v248, 48
    %v250 = vpop.permute.xlu0 %249
    %v252 = vrot.slane %v131, 4
    %253 = vrot.lane.b32.xlu0 %v252, 64
    %v254 = vpop.permute.xlu0 %253
    %v256 = vrot.slane %v131, 5
    %257 = vrot.lane.b32.xlu0 %v256, 80
    %v258 = vpop.permute.xlu0 %257
    %v260 = vrot.slane %v131, 6
    %261 = vrot.lane.b32.xlu0 %v260, 96
    %v262 = vpop.permute.xlu0 %261
    %v264 = vrot.slane %v131, 7
    %265 = vrot.lane.b32.xlu0 %v264, 112
    %v266 = vpop.permute.xlu0 %265
    %v268 = vsel %vm57, %v130, %v213
    %v269 = vsel %vm191, %v268, %v217
    %v270 = vsel %vm193, %v269, %v221
    %v271 = vsel %vm195, %v270, %v225
    %v272 = vsel %vm197, %v271, %v229
    %v273 = vsel %vm199, %v272, %v233
    %v274 = vsel %vm201, %v273, %v237
    %v275 = vsel %vm57, %v131, %v242
    %v276 = vsel %vm191, %v275, %v246
    %v277 = vsel %vm193, %v276, %v250
    %v278 = vsel %vm195, %v277, %v254
    %v279 = vsel %vm197, %v278, %v258
    %v280 = vsel %vm199, %v279, %v262
    %v281 = vsel %vm201, %v280, %v266
    %v284 = vrot.slane %v274, 7
    %v285 = vrot.slane %v281, 7
    %vm288 = vcmask 1040384
    %v289 = vsel %vm288, %v202, %v284
    %v290 = vsel %vm288, %v209, %v285
    %v291 = vld [vmem:[%s3] sm:$0xff]
    %v292 = vld [vmem:[%s3 + $0x8] sm:$0xff]
    %v293 = vld [vmem:[%s3 + $0x10] sm:$0xff]
    %v294 = vld [vmem:[%s3 + $0x18] sm:$0xff]
    %v295 = vld [vmem:[%s3 + $0x20] sm:$0xff]
    %v296 = vld [vmem:[%s3 + $0x28] sm:$0xff]
    %v297 = vld [vmem:[%s3 + $0x30] sm:$0xff]
    %v298 = vld [vmem:[%s3 + $0x38] sm:$0xff]
    %v299 = vld [vmem:[%s3 + $0x40] sm:$0xff]
    %v300 = vld [vmem:[%s3 + $0x48] sm:$0xff]
    %v301 = vld [vmem:[%s3 + $0x50] sm:$0xff]
    %v302 = vld [vmem:[%s3 + $0x58] sm:$0xff]
    %v303 = vld [vmem:[%s3 + $0x60] sm:$0xff]
    %v304 = vld [vmem:[%s3 + $0x68] sm:$0xff]
    %v305 = vld [vmem:[%s3 + $0x70] sm:$0xff]
    %v306 = vld [vmem:[%s3 + $0x78] sm:$0xff]
    %v307 = vld [vmem:[%s3 + $0x80] sm:$0xff]
    %v308 = vld [vmem:[%s3 + $0x88] sm:$0xff]
    %v309 = vld [vmem:[%s3 + $0x90] sm:$0xff]
    %v310 = vld [vmem:[%s3 + $0x98] sm:$0xff]
    %v311 = vld [vmem:[%s3 + $0xa0] sm:$0xff]
    %v312 = vld [vmem:[%s3 + $0xa8] sm:$0xff]
    %v313 = vld [vmem:[%s3 + $0xb0] sm:$0xff]
    %v314 = vld [vmem:[%s3 + $0xb8] sm:$0xff]
    %v315 = vld [vmem:[%s3 + $0xc0] sm:$0xff]
    %v316 = vld [vmem:[%s3 + $0xc8] sm:$0xff]
    %v317 = vld [vmem:[%s3 + $0xd0] sm:$0xff]
    %v318 = vld [vmem:[%s3 + $0xd8] sm:$0xff]
    %v319 = vld [vmem:[%s3 + $0xe0] sm:$0xff]
    %v320 = vld [vmem:[%s3 + $0xe8] sm:$0xff]
    %v321 = vld [vmem:[%s3 + $0xf0] sm:$0xff]
    %v322 = vld [vmem:[%s3 + $0xf8] sm:$0xff]
    %v323 = vld [vmem:[%s4] sm:$0x1]
    %v325 = vperm.slane %v323, 0
    %327 = vmatpush.msra.mxu0 %v306
    %328 = vmatpush.msra.mxu0 %v305
    %329 = vmatpush.msra.mxu0 %v304
    %330 = vmatpush.msra.mxu0 %v303
    %331 = vmatpush.msra.mxu0 %v302
    %332 = vmatpush.msra.mxu0 %v301
    %333 = vmatpush.msra.mxu0 %v300
    %334 = vmatpush.msra.mxu0 %v299
    %335 = vmatpush.msra.mxu0 %v298
    %336 = vmatpush.msra.mxu0 %v297
    %337 = vmatpush.msra.mxu0 %v296
    %338 = vmatpush.msra.mxu0 %v295
    %339 = vmatpush.msra.mxu0 %v294
    %340 = vmatpush.msra.mxu0 %v293
    %341 = vmatpush.msra.mxu0 %v292
    %342 = vmatpush.msra.mxu0 %v291
    %343 = vmatmul.f32.gmra.mxu0 %v289
    %v344 = vpop.f32.mrf.mxu0
    %v345 = vadd.f32 %v325, %v344
    %346 = vdwg.mxu0
    %347 = vmatpush.msra.mxu0 %v322
    %348 = vmatpush.msra.mxu0 %v321
    %349 = vmatpush.msra.mxu0 %v320
    %350 = vmatpush.msra.mxu0 %v319
    %351 = vmatpush.msra.mxu0 %v318
    %352 = vmatpush.msra.mxu0 %v317
    %353 = vmatpush.msra.mxu0 %v316
    %354 = vmatpush.msra.mxu0 %v315
    %355 = vmatpush.msra.mxu0 %v314
    %356 = vmatpush.msra.mxu0 %v313
    %357 = vmatpush.msra.mxu0 %v312
    %358 = vmatpush.msra.mxu0 %v311
    %359 = vmatpush.msra.mxu0 %v310
    %360 = vmatpush.msra.mxu0 %v309
    %361 = vmatpush.msra.mxu0 %v308
    %362 = vmatpush.msra.mxu0 %v307
    %363 = vmatmul.f32.gmra.mxu0 %v290
    %v364 = vpop.f32.mrf.mxu0
    %v365 = vadd.f32 %v345, %v364
    %366 = vdwg.mxu0
    %v367 = vmax.f32 %v365, 0.0
    %v368 = vld [vmem:[%s5] sm:$0xff]
    %v369 = vld [vmem:[%s5 + $0x8] sm:$0xff]
    %v370 = vld [vmem:[%s5 + $0x10] sm:$0xff]
    %v371 = vld [vmem:[%s5 + $0x18] sm:$0xff]
    %v372 = vld [vmem:[%s6] sm:$0x1]
    %v374 = vperm.slane %v372, 0
    %v377 = vsel %vm191, %v367, 0
    %379 = vmatpush.msra.mxu0 0.0
    %380 = vmatpush.msra.mxu0 0.0
    %381 = vmatpush.msra.mxu0 0.0
    %382 = vmatpush.msra.mxu0 0.0
    %383 = vmatpush.msra.mxu0 0.0
    %384 = vmatpush.msra.mxu0 0.0
    %385 = vmatpush.msra.mxu0 0.0
    %386 = vmatpush.msra.mxu0 0.0
    %387 = vmatpush.msra.mxu0 0.0
    %388 = vmatpush.msra.mxu0 0.0
    %389 = vmatpush.msra.mxu0 0.0
    %390 = vmatpush.msra.mxu0 0.0
    %391 = vmatpush.msra.mxu0 %v371
    %392 = vmatpush.msra.mxu0 %v370
    %393 = vmatpush.msra.mxu0 %v369
    %394 = vmatpush.msra.mxu0 %v368
    %395 = vmatmul.f32.gmra.mxu0 %v377
    %v396 = vpop.f32.mrf.mxu0
    %v397 = vadd.f32 %v374, %v396
    %398 = vdwg.mxu0
    %vm399 = vcmask 74752
    %v400 = vsel %vm399, %v397, -inf
    %401 = vmax.xlane.f32.xlu0 %v400
    %v402 = vpop.xlane.xlu0 %401
    %v403 = vsub.f32 %v397, %v402
    %v404 = vmul.f32 %v403, 1.442695
    %v405 = vpow.pop %v404
    %v406 = vsel %vm399, %v405, 0.0
    %407 = vadd.xlane.f32.xlu0 %v406
    %v408 = vpop.xlane.xlu0 %407
    %v409 = vlog2.pop %v408
    %v410 = vmul.f32 %v409, 0.6931472
    %v411 = vadd.f32 %v402, %v410
    %v412 = vsub.f32 %v397, %v411
    %413 = vst.msk [vmem:[#allocation2] sm:$0x3] %vm399, %v412
    // Predicated region
    $region30: #{net_forward.7} parent=1 // pred_check
      _
    $region31: #{net_forward.7} parent=1 // pred_check_branch
      %415 = sbr.rel (0) target = $region33
    $region32: #{net_forward.7} parent=1 // pred_region
      %417 = vsyncadd [#allocation3], 0
      %s419 = sshll.u32 [#allocation2], 4
      %s420 = int_to_ptr.vmem [resolvable:$true] %s419
      %s421 = sshll.u32 %s7, 4
      %s422 = int_to_ptr.hbm [resolvable:$true] %s421
      %424 = dma.vmem_to_hbm [thread:$0]  %s420, 32, %s422, [#allocation3]
    $region33: #{net_forward.7} parent=1 // pred_fallthru
      _
    // Predicated region
    $region34: #{net_forward.7} parent=1 // pred_check
      _
    $region35: #{net_forward.7} parent=1 // pred_check_branch
      %426 = sbr.rel (0) target = $region37
    $region36: #{net_forward.7} parent=1 // pred_region
      %428 = dma.done [#allocation3], 32
    $region37: #{net_forward.7} parent=1 // pred_fallthru
      _
    %429 = vsyncpa [#allocation3], 1

</llo_original>
